<compile_context>
chip_gen: v6e
topology: v6e:2x2x1
jax: 0.10.0
libtpu: 0.0.40
codegen_flags: <defaults>
</compile_context>

<pallas_src>
import math
from functools import partial

import jax
import jax.numpy as jnp
from jax.experimental import pallas as pl
from jax.experimental.pallas import tpu as pltpu


def _round_up(x: int, m: int) -> int:
    return ((x + m - 1) // m) * m


def _fused_mlp_kernel(x_ref, w1_ref, b1_ref, w2_ref, b2_ref, o_ref):
    # fc1: (tm, Kp) @ (Kp, Hp) -> f32 accumulate on the MXU
    feat = jnp.dot(x_ref[...], w1_ref[...], preferred_element_type=jnp.float32)
    # bias + ReLU in f32 (VPU-safe on all generations incl. v5e)
    feat = jnp.maximum(feat + b1_ref[...].astype(jnp.float32), 0.0)
    # fc2: (tm, Hp) @ (Hp, Np) -> f32 accumulate; cast feat to the weight dtype
    # so bf16 weights hit the native bf16 MXU path on v6e/v7x.
    out = jnp.dot(feat.astype(w2_ref.dtype), w2_ref[...],
                  preferred_element_type=jnp.float32)
    out = out + b2_ref[...].astype(jnp.float32)
    o_ref[...] = out.astype(o_ref.dtype)


def prepare_two_layer_params(w1, b1, w2, b2, *, param_dtype=jnp.float32):
    """One-time parameter prep: transpose, cast, zero-pad to lane-dense layouts.

    w1: (H, K) torch-layout fc1 weight; b1: (H,); w2: (N, H); b2: (N,).
    Returns a dict of padded arrays + static dims; reuse across forwards.
    """
    H, K = w1.shape
    N = w2.shape[0]
    Kp, Hp, Np = _round_up(K, 128), _round_up(H, 128), _round_up(N, 128)

    w1p = jnp.zeros((Kp, Hp), param_dtype).at[:K, :H].set(w1.T.astype(param_dtype))
    b1p = jnp.zeros((1, Hp), jnp.float32).at[0, :H].set(b1.astype(jnp.float32))
    w2p = jnp.zeros((Hp, Np), param_dtype).at[:H, :N].set(w2.T.astype(param_dtype))
    b2p = jnp.zeros((1, Np), jnp.float32).at[0, :N].set(b2.astype(jnp.float32))

    return dict(w1p=w1p, b1p=b1p, w2p=w2p, b2p=b2p,
                K=K, H=H, N=N, Kp=Kp, Hp=Hp, Np=Np,
                param_dtype=param_dtype)


def two_layer_net_forward(x, params, *, tm_max=256):
    """TwoLayerNet.forward: fc2(relu(fc1(x.view(B, -1)))) in one pallas_call."""
    B = x.shape[0]
    x2d = x.reshape(B, -1)
    K, N = params["K"], params["N"]
    Kp, Hp, Np = params["Kp"], params["Hp"], params["Np"]
    assert x2d.shape[1] == K, f"expected {K} input features, got {x2d.shape[1]}"

    pdtype = params["param_dtype"]
    tm = min(_round_up(B, 8), tm_max)
    Bp = _round_up(B, tm)

    # Only the (tiny) activation is padded per-forward; weights are pre-padded.
    xp = jnp.zeros((Bp, Kp), pdtype).at[:B, :K].set(x2d.astype(pdtype))

    grid = (Bp // tm,)  # single "parallel" batch-tile axis (size 1 at B=8)

    out = pl.pallas_call(
        _fused_mlp_kernel,
        out_shape=jax.ShapeDtypeStruct((Bp, Np), jnp.float32),
        grid_spec=pltpu.PrefetchScalarGridSpec(
            num_scalar_prefetch=0,
            grid=grid,
            in_specs=[
                pl.BlockSpec((tm, Kp), lambda i: (i, 0)),   # x batch tile
                pl.BlockSpec((Kp, Hp), lambda i: (0, 0)),   # W1 (full, constant)
                pl.BlockSpec((1, Hp), lambda i: (0, 0)),    # b1
                pl.BlockSpec((Hp, Np), lambda i: (0, 0)),   # W2 (full, constant)
                pl.BlockSpec((1, Np), lambda i: (0, 0)),    # b2
            ],
            out_specs=pl.BlockSpec((tm, Np), lambda i: (i, 0)),
        ),
        compiler_params=pltpu.CompilerParams(
            dimension_semantics=("parallel",)),
    )(xp, params["w1p"], params["b1p"], params["w2p"], params["b2p"])

    return out[:B, :N]


def reference_forward(x, w1, b1, w2, b2):
    B = x.shape[0]
    x2d = x.reshape(B, -1)
    feat = jnp.maximum(x2d @ w1.T + b1[None, :], 0.0)
    return feat @ w2.T + b2[None, :]


if __name__ == "__main__":
    n_features = 28 * 28      # 784, as in the PyTorch script
    n_classes = 10
    batch = 8

    key = jax.random.PRNGKey(0)
    kx, kw1, kb1, kw2, kb2 = jax.random.split(key, 5)

    # nn.Linear-style init: uniform(-1/sqrt(fan_in), 1/sqrt(fan_in))
    s1 = 1.0 / math.sqrt(n_features)
    w1 = jax.random.uniform(kw1, (n_features, n_features), jnp.float32, -s1, s1)
    b1 = jax.random.uniform(kb1, (n_features,), jnp.float32, -s1, s1)
    s2 = 1.0 / math.sqrt(n_features)
    w2 = jax.random.uniform(kw2, (n_classes, n_features), jnp.float32, -s2, s2)
    b2 = jax.random.uniform(kb2, (n_classes,), jnp.float32, -s2, s2)

    x = jax.random.normal(kx, (batch, 1, 28, 28), jnp.float32)

    # One-time parameter prep (hoisted out of the per-forward path).
    # param_dtype=jnp.bfloat16 halves the weight HBM stream on v6e/v7x.
    params = prepare_two_layer_params(w1, b1, w2, b2, param_dtype=jnp.float32)

    out = two_layer_net_forward(x, params)
    out = jax.block_until_ready(out)

    ref = reference_forward(x, w1, b1, w2, b2)
    assert out.shape == (batch, n_classes)
    assert jnp.allclose(out, ref, atol=2e-3, rtol=2e-3), "mismatch vs reference"

    # TODO(synk): cross_entropy loss and argmax predict() are not part of the
    # forward pass; left to plain JAX outside the kernel.
    print("KERNEL_OK")
</pallas_src>

<mosaic_0001>
module attributes {stable_mosaic.version = 11 : i64} {
  func.func @_fused_mlp_kernel(%arg0: i32, %arg1: memref<8x896xf32, #tpu.memory_space<vmem>>, %arg2: memref<896x896xf32, #tpu.memory_space<vmem>>, %arg3: memref<1x896xf32, #tpu.memory_space<vmem>>, %arg4: memref<896x128xf32, #tpu.memory_space<vmem>>, %arg5: memref<1x128xf32, #tpu.memory_space<vmem>>, %arg6: memref<8x128xf32, #tpu.memory_space<vmem>>) attributes {dimension_semantics = [#tpu.dimension_semantics<parallel>], iteration_bounds = array<i64: 1>, scalar_prefetch = 0 : i64, scratch_operands = 0 : i64, tpu.core_type = #tpu.core_type<tc>, window_params = [{transform_indices = @transform_0, window_bounds = array<i64: 8, 896>}, {pipeline_mode = #tpu.pipeline_mode<synchronous>, transform_indices = @transform_1, window_bounds = array<i64: 896, 896>}, {pipeline_mode = #tpu.pipeline_mode<synchronous>, transform_indices = @transform_2, window_bounds = array<i64: 1, 896>}, {pipeline_mode = #tpu.pipeline_mode<synchronous>, transform_indices = @transform_3, window_bounds = array<i64: 896, 128>}, {pipeline_mode = #tpu.pipeline_mode<synchronous>, transform_indices = @transform_4, window_bounds = array<i64: 1, 128>}, {transform_indices = @transform_5, window_bounds = array<i64: 8, 128>}]} {
    %c0 = arith.constant 0 : index
    %c0_0 = arith.constant 0 : index
    %0 = vector.load %arg1[%c0, %c0_0] : memref<8x896xf32, #tpu.memory_space<vmem>>, vector<8x896xf32>
    %c0_1 = arith.constant 0 : index
    %c0_2 = arith.constant 0 : index
    %1 = vector.load %arg2[%c0_1, %c0_2] : memref<896x896xf32, #tpu.memory_space<vmem>>, vector<896x896xf32>
    %cst = arith.constant dense<0.000000e+00> : vector<8x896xf32>
    %2 = tpu.matmul %0, %1, %cst {dimension_numbers = #tpu.dot_dimension_numbers<[1], [0], [0], [1], [0, 0, 1, 1], [], []>} : vector<8x896xf32>, vector<896x896xf32>, vector<8x896xf32> -> vector<8x896xf32>
    %c0_3 = arith.constant 0 : index
    %c0_4 = arith.constant 0 : index
    %3 = vector.load %arg3[%c0_3, %c0_4] : memref<1x896xf32, #tpu.memory_space<vmem>>, vector<1x896xf32>
    %4 = vector.broadcast %3 : vector<1x896xf32> to vector<8x896xf32>
    %5 = arith.addf %2, %4 : vector<8x896xf32>
    %cst_5 = arith.constant 0.000000e+00 : f32
    %6 = vector.broadcast %cst_5 : f32 to vector<8x896xf32>
    %7 = arith.maximumf %5, %6 : vector<8x896xf32>
    %c0_6 = arith.constant 0 : index
    %c0_7 = arith.constant 0 : index
    %8 = vector.load %arg4[%c0_6, %c0_7] : memref<896x128xf32, #tpu.memory_space<vmem>>, vector<896x128xf32>
    %cst_8 = arith.constant dense<0.000000e+00> : vector<8x128xf32>
    %9 = tpu.matmul %7, %8, %cst_8 {dimension_numbers = #tpu.dot_dimension_numbers<[1], [0], [0], [1], [0, 0, 1, 1], [], []>} : vector<8x896xf32>, vector<896x128xf32>, vector<8x128xf32> -> vector<8x128xf32>
    %c0_9 = arith.constant 0 : index
    %c0_10 = arith.constant 0 : index
    %10 = vector.load %arg5[%c0_9, %c0_10] : memref<1x128xf32, #tpu.memory_space<vmem>>, vector<1x128xf32>
    %11 = vector.broadcast %10 : vector<1x128xf32> to vector<8x128xf32>
    %12 = arith.addf %9, %11 : vector<8x128xf32>
    %c0_11 = arith.constant 0 : index
    %c0_12 = arith.constant 0 : index
    %13 = vector.load %arg6[%c0_11, %c0_12] : memref<8x128xf32, #tpu.memory_space<vmem>>, vector<8x128xf32>
    tpu.vector_store %arg6[%c0_11, %c0_12], %12 {strides = array<i32>} : memref<8x128xf32, #tpu.memory_space<vmem>>, vector<8x128xf32>,
    return
  }
  func.func @transform_0(%arg0: i32) -> (i32, i32) {
    %c0_i32 = arith.constant 0 : i32
    %c0_i32_0 = arith.constant 0 : i32
    return %arg0, %c0_i32 : i32, i32
  }
  func.func @transform_1(%arg0: i32) -> (i32, i32) {
    %c0_i32 = arith.constant 0 : i32
    %c0_i32_0 = arith.constant 0 : i32
    %c0_i32_1 = arith.constant 0 : i32
    return %c0_i32, %c0_i32_0 : i32, i32
  }
  func.func @transform_2(%arg0: i32) -> (i32, i32) {
    %c0_i32 = arith.constant 0 : i32
    %c0_i32_0 = arith.constant 0 : i32
    %c0_i32_1 = arith.constant 0 : i32
    return %c0_i32, %c0_i32_0 : i32, i32
  }
  func.func @transform_3(%arg0: i32) -> (i32, i32) {
    %c0_i32 = arith.constant 0 : i32
    %c0_i32_0 = arith.constant 0 : i32
    %c0_i32_1 = arith.constant 0 : i32
    return %c0_i32, %c0_i32_0 : i32, i32
  }
  func.func @transform_4(%arg0: i32) -> (i32, i32) {
    %c0_i32 = arith.constant 0 : i32
    %c0_i32_0 = arith.constant 0 : i32
    %c0_i32_1 = arith.constant 0 : i32
    return %c0_i32, %c0_i32_0 : i32, i32
  }
  func.func @transform_5(%arg0: i32) -> (i32, i32) {
    %c0_i32 = arith.constant 0 : i32
    %c0_i32_0 = arith.constant 0 : i32
    return %arg0, %c0_i32 : i32, i32
  }
}

</mosaic_0001>

<llo_original>
// kernel: tpu_custom_call.1
$region0: #{tpu_custom_call.1}
  #allocation0 [shape = 'u32[]', space=smem, size = 0x4, offset = 0x4, fixed_abs, tag = 'smem constant byte address 0x4 - core index']
  #allocation1 [shape = 'u32[144,128]{1,0:T(1,128)}', space=vmem, size = 0x12000, scoped, tag = 'internal scratch']
  %s0 = inlined_call_operand.hbm [shape: f32[8,896], index: 0, kind: input, shape index: {}]
  %s1 = inlined_call_operand.hbm [shape: f32[896,896], index: 1, kind: input, shape index: {}]
  %s2 = inlined_call_operand.hbm [shape: f32[1,896], index: 2, kind: input, shape index: {}]
  %s3 = inlined_call_operand.hbm [shape: f32[896,128], index: 3, kind: input, shape index: {}]
  %s4 = inlined_call_operand.hbm [shape: f32[1,128], index: 4, kind: input, shape index: {}]
  %s5 = inlined_call_operand.hbm [shape: f32[8,128], index: 5, kind: output, shape index: {}]
  %s6 = sld [smem:[#allocation0]]
  $region50: #{tpu_custom_call.1} parent=0
    _
  %s8 = ssub.s32 1, %s6
  %s9 = scalar_select 0, %s8, %s6
  $region1: #{tpu_custom_call.1} parent=0
    #allocation2 [shape = 'u8[28672]{0}', space=vmem, size = 0x7000, scoped, tag = 'input window, operand 0, single buffered']
    #allocation3 [shape = 's32[1]{0}', space=sflag, size = 0x4, scoped, tag = 'scoped memory for tpu_custom_call.1']
    #allocation4 [shape = 's32[1]{0}', space=sflag, size = 0x4, scoped, tag = 'scoped memory for tpu_custom_call.1']
    #allocation5 [shape = 'u8[3211264]{0}', space=vmem, size = 0x310000, scoped, tag = 'input window, operand 1, single buffered']
    #allocation6 [shape = 's32[1]{0}', space=sflag, size = 0x4, scoped, tag = 'scoped memory for tpu_custom_call.1']
    #allocation7 [shape = 'u8[3584]{0}', space=vmem, size = 0x1000, scoped, tag = 'input window, operand 2, single buffered']
    #allocation8 [shape = 'u8[458752]{0}', space=vmem, size = 0x70000, scoped, tag = 'input window, operand 3, single buffered']
    #allocation9 [shape = 's32[1]{0}', space=sflag, size = 0x4, scoped, tag = 'scoped memory for tpu_custom_call.1']
    #allocation10 [shape = 'u8[512]{0}', space=vmem, size = 0x400, scoped, tag = 'input window, operand 4, single buffered']
    #allocation11 [shape = 'u8[4096]{0}', space=vmem, size = 0x1000, scoped, tag = 'output window, operand 0, single buffered']
    %10 = vsyncpa [#allocation3], 0
    %11 = vsyncpa [#allocation6], 0
    %12 = vsyncpa [#allocation9], 0
    %13 = vsyncpa [#allocation4], 0
    // Predicated region
    $region2: #{tpu_custom_call.1} parent=1 // pred_check
      _
    $region3: #{tpu_custom_call.1} parent=1 // pred_check_branch
      %15 = sbr.rel (0) target = $region5
    $region4: #{tpu_custom_call.1} parent=1 // pred_region
      %s17 = ssub.s32 896, 896
      %18 = vsyncadd [#allocation3], %s17
      %s20 = sshll.u32 [#allocation2], 4
      %s21 = int_to_ptr.vmem [resolvable:$true] %s20
      %23 = dma.hbm_to_vmem [thread:$0]  %s0, 896, %s21, [#allocation3]
    $region5: #{tpu_custom_call.1} parent=1 // pred_fallthru
      _
    // Predicated region
    $region6: #{tpu_custom_call.1} parent=1 // pred_check
      _
    $region7: #{tpu_custom_call.1} parent=1 // pred_check_branch
      %25 = sbr.rel (0) target = $region9
    $region8: #{tpu_custom_call.1} parent=1 // pred_region
      %s27 = ssub.s32 100352, 100352
      %28 = vsyncadd [#allocation6], %s27
      %s29 = sshll.u32 [#allocation5], 4
      %s30 = int_to_ptr.vmem [resolvable:$true] %s29
      %35 = dma.hbm_to_vmem [thread:$0]  %s1, 100352, %s30, [#allocation6], 896, 896, 56
    $region9: #{tpu_custom_call.1} parent=1 // pred_fallthru
      _
    // Predicated region
    $region10: #{tpu_custom_call.1} parent=1 // pred_check
      _
    $region11: #{tpu_custom_call.1} parent=1 // pred_check_branch
      %37 = sbr.rel (0) target = $region13
    $region12: #{tpu_custom_call.1} parent=1 // pred_region
      %s39 = ssub.s32 112, 112
      %40 = vsyncadd [#allocation6], %s39
      %s42 = sshll.u32 [#allocation7], 4
      %s43 = int_to_ptr.vmem [resolvable:$true] %s42
      %45 = dma.hbm_to_vmem [thread:$0]  %s2, 112, %s43, [#allocation6]
    $region13: #{tpu_custom_call.1} parent=1 // pred_fallthru
      _
    // Predicated region
    $region14: #{tpu_custom_call.1} parent=1 // pred_check
      _
    $region15: #{tpu_custom_call.1} parent=1 // pred_check_branch
      %47 = sbr.rel (0) target = $region17
    $region16: #{tpu_custom_call.1} parent=1 // pred_region
      %s49 = ssub.s32 14336, 14336
      %50 = vsyncadd [#allocation9], %s49
      %s51 = sshll.u32 [#allocation8], 4
      %s52 = int_to_ptr.vmem [resolvable:$true] %s51
      %57 = dma.hbm_to_vmem [thread:$0]  %s3, 14336, %s52, [#allocation9], 128, 128, 8
    $region17: #{tpu_custom_call.1} parent=1 // pred_fallthru
      _
    // Predicated region
    $region18: #{tpu_custom_call.1} parent=1 // pred_check
      _
    $region19: #{tpu_custom_call.1} parent=1 // pred_check_branch
      %59 = sbr.rel (0) target = $region21
    $region20: #{tpu_custom_call.1} parent=1 // pred_region
      %s61 = ssub.s32 16, 16
      %62 = vsyncadd [#allocation9], %s61
      %s64 = sshll.u32 [#allocation10], 4
      %s65 = int_to_ptr.vmem [resolvable:$true] %s64
      %67 = dma.hbm_to_vmem [thread:$0]  %s4, 16, %s65, [#allocation9]
    $region21: #{tpu_custom_call.1} parent=1 // pred_fallthru
      _
    // Predicated region
    $region22: #{tpu_custom_call.1} parent=1 // pred_check
      _
    $region23: #{tpu_custom_call.1} parent=1 // pred_check_branch
      %69 = sbr.rel (0) target = $region25
    $region24: #{tpu_custom_call.1} parent=1 // pred_region
      %70 = dma.done [#allocation3], 896
    $region25: #{tpu_custom_call.1} parent=1 // pred_fallthru
      _
    // Predicated region
    $region26: #{tpu_custom_call.1} parent=1 // pred_check
      _
    $region27: #{tpu_custom_call.1} parent=1 // pred_check_branch
      %72 = sbr.rel (0) target = $region29
    $region28: #{tpu_custom_call.1} parent=1 // pred_region
      %73 = dma.done [#allocation6], 100352
    $region29: #{tpu_custom_call.1} parent=1 // pred_fallthru
      _
    // Predicated region
    $region30: #{tpu_custom_call.1} parent=1 // pred_check
      _
    $region31: #{tpu_custom_call.1} parent=1 // pred_check_branch
      %75 = sbr.rel (0) target = $region33
    $region32: #{tpu_custom_call.1} parent=1 // pred_region
      %76 = dma.done [#allocation6], 112
    $region33: #{tpu_custom_call.1} parent=1 // pred_fallthru
      _
    // Predicated region
    $region34: #{tpu_custom_call.1} parent=1 // pred_check
      _
    $region35: #{tpu_custom_call.1} parent=1 // pred_check_branch
      %78 = sbr.rel (0) target = $region37
    $region36: #{tpu_custom_call.1} parent=1 // pred_region
      %79 = dma.done [#allocation9], 14336
    $region37: #{tpu_custom_call.1} parent=1 // pred_fallthru
      _
    // Predicated region
    $region38: #{tpu_custom_call.1} parent=1 // pred_check
      _
    $region39: #{tpu_custom_call.1} parent=1 // pred_check_branch
      %81 = sbr.rel (0) target = $region41
    $region40: #{tpu_custom_call.1} parent=1 // pred_region
      %82 = dma.done [#allocation9], 16
    $region41: #{tpu_custom_call.1} parent=1 // pred_fallthru
      _
    %v83 = vld [vmem:[#allocation2] sm:$0xff]
    %v84 = vld [vmem:[#allocation2 + $0x8] sm:$0xff]
    %v85 = vld [vmem:[#allocation2 + $0x10] sm:$0xff]
    %v86 = vld [vmem:[#allocation2 + $0x18] sm:$0xff]
    %v87 = vld [vmem:[#allocation2 + $0x20] sm:$0xff]
    %v88 = vld [vmem:[#allocation2 + $0x28] sm:$0xff]
    %v89 = vld [vmem:[#allocation2 + $0x30] sm:$0xff]
    %v90 = vld [vmem:[#allocation5] sm:$0xff]
    %v91 = vld [vmem:[#allocation5 + $0x8] sm:$0xff]
    %v92 = vld [vmem:[#allocation5 + $0x10] sm:$0xff]
    %v93 = vld [vmem:[#allocation5 + $0x18] sm:$0xff]
    %v94 = vld [vmem:[#allocation5 + $0x20] sm:$0xff]
    %v95 = vld [vmem:[#allocation5 + $0x28] sm:$0xff]
    %v96 = vld [vmem:[#allocation5 + $0x30] sm:$0xff]
    %v97 = vld [vmem:[#allocation5 + $0x38] sm:$0xff]
    %v98 = vld [vmem:[#allocation5 + $0x40] sm:$0xff]
    %v99 = vld [vmem:[#allocation5 + $0x48] sm:$0xff]
    %v100 = vld [vmem:[#allocation5 + $0x50] sm:$0xff]
    %v101 = vld [vmem:[#allocation5 + $0x58] sm:$0xff]
    %v102 = vld [vmem:[#allocation5 + $0x60] sm:$0xff]
    %v103 = vld [vmem:[#allocation5 + $0x68] sm:$0xff]
    %v104 = vld [vmem:[#allocation5 + $0x70] sm:$0xff]
    %v105 = vld [vmem:[#allocation5 + $0x78] sm:$0xff]
    %v106 = vld [vmem:[#allocation5 + $0x80] sm:$0xff]
    %v107 = vld [vmem:[#allocation5 + $0x88] sm:$0xff]
    %v108 = vld [vmem:[#allocation5 + $0x90] sm:$0xff]
    %v109 = vld [vmem:[#allocation5 + $0x98] sm:$0xff]
    %v110 = vld [vmem:[#allocation5 + $0xa0] sm:$0xff]
    %v111 = vld [vmem:[#allocation5 + $0xa8] sm:$0xff]
    %v112 = vld [vmem:[#allocation5 + $0xb0] sm:$0xff]
    %v113 = vld [vmem:[#allocation5 + $0xb8] sm:$0xff]
    %v114 = vld [vmem:[#allocation5 + $0xc0] sm:$0xff]
    %v115 = vld [vmem:[#allocation5 + $0xc8] sm:$0xff]
    %v116 = vld [vmem:[#allocation5 + $0xd0] sm:$0xff]
    %v117 = vld [vmem:[#allocation5 + $0xd8] sm:$0xff]
    %v118 = vld [vmem:[#allocation5 + $0xe0] sm:$0xff]
    %v119 = vld [vmem:[#allocation5 + $0xe8] sm:$0xff]
    %v120 = vld [vmem:[#allocation5 + $0xf0] sm:$0xff]
    %v121 = vld [vmem:[#allocation5 + $0xf8] sm:$0xff]
    %v122 = vld [vmem:[#allocation5 + $0x100] sm:$0xff]
    %v123 = vld [vmem:[#allocation5 + $0x108] sm:$0xff]
    %v124 = vld [vmem:[#allocation5 + $0x110] sm:$0xff]
    %v125 = vld [vmem:[#allocation5 + $0x118] sm:$0xff]
    %v126 = vld [vmem:[#allocation5 + $0x120] sm:$0xff]
    %v127 = vld [vmem:[#allocation5 + $0x128] sm:$0xff]
    %v128 = vld [vmem:[#allocation5 + $0x130] sm:$0xff]
    %v129 = vld [vmem:[#allocation5 + $0x138] sm:$0xff]
    %v130 = vld [vmem:[#allocation5 + $0x140] sm:$0xff]
    %v131 = vld [vmem:[#allocation5 + $0x148] sm:$0xff]
    %v132 = vld [vmem:[#allocation5 + $0x150] sm:$0xff]
    %v133 = vld [vmem:[#allocation5 + $0x158] sm:$0xff]
    %v134 = vld [vmem:[#allocation5 + $0x160] sm:$0xff]
    %v135 = vld [vmem:[#allocation5 + $0x168] sm:$0xff]
    %v136 = vld [vmem:[#allocation5 + $0x170] sm:$0xff]
    %v137 = vld [vmem:[#allocation5 + $0x178] sm:$0xff]
    %v138 = vld [vmem:[#allocation5 + $0x180] sm:$0xff]
    %v139 = vld [vmem:[#allocation5 + $0x188] sm:$0xff]
    %v140 = vld [vmem:[#allocation5 + $0x190] sm:$0xff]
    %v141 = vld [vmem:[#allocation5 + $0x198] sm:$0xff]
    %v142 = vld [vmem:[#allocation5 + $0x1a0] sm:$0xff]
    %v143 = vld [vmem:[#allocation5 + $0x1a8] sm:$0xff]
    %v144 = vld [vmem:[#allocation5 + $0x1b0] sm:$0xff]
    %v145 = vld [vmem:[#allocation5 + $0x1b8] sm:$0xff]
    %v146 = vld [vmem:[#allocation5 + $0x1c0] sm:$0xff]
    %v147 = vld [vmem:[#allocation5 + $0x1c8] sm:$0xff]
    %v148 = vld [vmem:[#allocation5 + $0x1d0] sm:$0xff]
    %v149 = vld [vmem:[#allocation5 + $0x1d8] sm:$0xff]
    %v150 = vld [vmem:[#allocation5 + $0x1e0] sm:$0xff]
    %v151 = vld [vmem:[#allocation5 + $0x1e8] sm:$0xff]
    %v152 = vld [vmem:[#allocation5 + $0x1f0] sm:$0xff]
    %v153 = vld [vmem:[#allocation5 + $0x1f8] sm:$0xff]
    %v154 = vld [vmem:[#allocation5 + $0x200] sm:$0xff]
    %v155 = vld [vmem:[#allocation5 + $0x208] sm:$0xff]
    %v156 = vld [vmem:[#allocation5 + $0x210] sm:$0xff]
    %v157 = vld [vmem:[#allocation5 + $0x218] sm:$0xff]
    %v158 = vld [vmem:[#allocation5 + $0x220] sm:$0xff]
    %v159 = vld [vmem:[#allocation5 + $0x228] sm:$0xff]
    %v160 = vld [vmem:[#allocation5 + $0x230] sm:$0xff]
    %v161 = vld [vmem:[#allocation5 + $0x238] sm:$0xff]
    %v162 = vld [vmem:[#allocation5 + $0x240] sm:$0xff]
    %v163 = vld [vmem:[#allocation5 + $0x248] sm:$0xff]
    %v164 = vld [vmem:[#allocation5 + $0x250] sm:$0xff]
    %v165 = vld [vmem:[#allocation5 + $0x258] sm:$0xff]
    %v166 = vld [vmem:[#allocation5 + $0x260] sm:$0xff]
    %v167 = vld [vmem:[#allocation5 + $0x268] sm:$0xff]
    %v168 = vld [vmem:[#allocation5 + $0x270] sm:$0xff]
    %v169 = vld [vmem:[#allocation5 + $0x278] sm:$0xff]
    %v170 = vld [vmem:[#allocation5 + $0x280] sm:$0xff]
    %v171 = vld [vmem:[#allocation5 + $0x288] sm:$0xff]
    %v172 = vld [vmem:[#allocation5 + $0x290] sm:$0xff]
    %v173 = vld [vmem:[#allocation5 + $0x298] sm:$0xff]
    %v174 = vld [vmem:[#allocation5 + $0x2a0] sm:$0xff]
    %v175 = vld [vmem:[#allocation5 + $0x2a8] sm:$0xff]
    %v176 = vld [vmem:[#allocation5 + $0x2b0] sm:$0xff]
    %v177 = vld [vmem:[#allocation5 + $0x2b8] sm:$0xff]
    %v178 = vld [vmem:[#allocation5 + $0x2c0] sm:$0xff]
    %v179 = vld [vmem:[#allocation5 + $0x2c8] sm:$0xff]
    %v180 = vld [vmem:[#allocation5 + $0x2d0] sm:$0xff]
    %v181 = vld [vmem:[#allocation5 + $0x2d8] sm:$0xff]
    %v182 = vld [vmem:[#allocation5 + $0x2e0] sm:$0xff]
    %v183 = vld [vmem:[#allocation5 + $0x2e8] sm:$0xff]
    %v184 = vld [vmem:[#allocation5 + $0x2f0] sm:$0xff]
    %v185 = vld [vmem:[#allocation5 + $0x2f8] sm:$0xff]
    %v186 = vld [vmem:[#allocation5 + $0x300] sm:$0xff]
    %v187 = vld [vmem:[#allocation5 + $0x308] sm:$0xff]
    %v188 = vld [vmem:[#allocation5 + $0x310] sm:$0xff]
    %v189 = vld [vmem:[#allocation5 + $0x318] sm:$0xff]
    %v190 = vld [vmem:[#allocation5 + $0x320] sm:$0xff]
    %v191 = vld [vmem:[#allocation5 + $0x328] sm:$0xff]
    %v192 = vld [vmem:[#allocation5 + $0x330] sm:$0xff]
    %v193 = vld [vmem:[#allocation5 + $0x338] sm:$0xff]
    %v194 = vld [vmem:[#allocation5 + $0x340] sm:$0xff]
    %v195 = vld [vmem:[#allocation5 + $0x348] sm:$0xff]
    %v196 = vld [vmem:[#allocation5 + $0x350] sm:$0xff]
    %v197 = vld [vmem:[#allocation5 + $0x358] sm:$0xff]
    %v198 = vld [vmem:[#allocation5 + $0x360] sm:$0xff]
    %v199 = vld [vmem:[#allocation5 + $0x368] sm:$0xff]
    %v200 = vld [vmem:[#allocation5 + $0x370] sm:$0xff]
    %v201 = vld [vmem:[#allocation5 + $0x378] sm:$0xff]
    %v202 = vld [vmem:[#allocation5 + $0x380] sm:$0xff]
    %v203 = vld [vmem:[#allocation5 + $0x388] sm:$0xff]
    %v204 = vld [vmem:[#allocation5 + $0x390] sm:$0xff]
    %v205 = vld [vmem:[#allocation5 + $0x398] sm:$0xff]
    %v206 = vld [vmem:[#allocation5 + $0x3a0] sm:$0xff]
    %v207 = vld [vmem:[#allocation5 + $0x3a8] sm:$0xff]
    %v208 = vld [vmem:[#allocation5 + $0x3b0] sm:$0xff]
    %v209 = vld [vmem:[#allocation5 + $0x3b8] sm:$0xff]
    %v210 = vld [vmem:[#allocation5 + $0x3c0] sm:$0xff]
    %v211 = vld [vmem:[#allocation5 + $0x3c8] sm:$0xff]
    %v212 = vld [vmem:[#allocation5 + $0x3d0] sm:$0xff]
    %v213 = vld [vmem:[#allocation5 + $0x3d8] sm:$0xff]
    %v214 = vld [vmem:[#allocation5 + $0x3e0] sm:$0xff]
    %v215 = vld [vmem:[#allocation5 + $0x3e8] sm:$0xff]
    %v216 = vld [vmem:[#allocation5 + $0x3f0] sm:$0xff]
    %v217 = vld [vmem:[#allocation5 + $0x3f8] sm:$0xff]
    %v218 = vld [vmem:[#allocation5 + $0x400] sm:$0xff]
    %v219 = vld [vmem:[#allocation5 + $0x408] sm:$0xff]
    %v220 = vld [vmem:[#allocation5 + $0x410] sm:$0xff]
    %v221 = vld [vmem:[#allocation5 + $0x418] sm:$0xff]
    %v222 = vld [vmem:[#allocation5 + $0x420] sm:$0xff]
    %v223 = vld [vmem:[#allocation5 + $0x428] sm:$0xff]
    %v224 = vld [vmem:[#allocation5 + $0x430] sm:$0xff]
    %v225 = vld [vmem:[#allocation5 + $0x438] sm:$0xff]
    %v226 = vld [vmem:[#allocation5 + $0x440] sm:$0xff]
    %v227 = vld [vmem:[#allocation5 + $0x448] sm:$0xff]
    %v228 = vld [vmem:[#allocation5 + $0x450] sm:$0xff]
    %v229 = vld [vmem:[#allocation5 + $0x458] sm:$0xff]
    %v230 = vld [vmem:[#allocation5 + $0x460] sm:$0xff]
    %v231 = vld [vmem:[#allocation5 + $0x468] sm:$0xff]
    %v232 = vld [vmem:[#allocation5 + $0x470] sm:$0xff]
    %v233 = vld [vmem:[#allocation5 + $0x478] sm:$0xff]
    %v234 = vld [vmem:[#allocation5 + $0x480] sm:$0xff]
    %v235 = vld [vmem:[#allocation5 + $0x488] sm:$0xff]
    %v236 = vld [vmem:[#allocation5 + $0x490] sm:$0xff]
    %v237 = vld [vmem:[#allocation5 + $0x498] sm:$0xff]
    %v238 = vld [vmem:[#allocation5 + $0x4a0] sm:$0xff]
    %v239 = vld [vmem:[#allocation5 + $0x4a8] sm:$0xff]
    %v240 = vld [vmem:[#allocation5 + $0x4b0] sm:$0xff]
    %v241 = vld [vmem:[#allocation5 + $0x4b8] sm:$0xff]
    %v242 = vld [vmem:[#allocation5 + $0x4c0] sm:$0xff]
    %v243 = vld [vmem:[#allocation5 + $0x4c8] sm:$0xff]
    %v244 = vld [vmem:[#allocation5 + $0x4d0] sm:$0xff]
    %v245 = vld [vmem:[#allocation5 + $0x4d8] sm:$0xff]
    %v246 = vld [vmem:[#allocation5 + $0x4e0] sm:$0xff]
    %v247 = vld [vmem:[#allocation5 + $0x4e8] sm:$0xff]
    %v248 = vld [vmem:[#allocation5 + $0x4f0] sm:$0xff]
    %v249 = vld [vmem:[#allocation5 + $0x4f8] sm:$0xff]
    %v250 = vld [vmem:[#allocation5 + $0x500] sm:$0xff]
    %v251 = vld [vmem:[#allocation5 + $0x508] sm:$0xff]
    %v252 = vld [vmem:[#allocation5 + $0x510] sm:$0xff]
    %v253 = vld [vmem:[#allocation5 + $0x518] sm:$0xff]
    %v254 = vld [vmem:[#allocation5 + $0x520] sm:$0xff]
    %v255 = vld [vmem:[#allocation5 + $0x528] sm:$0xff]
    %v256 = vld [vmem:[#allocation5 + $0x530] sm:$0xff]
    %v257 = vld [vmem:[#allocation5 + $0x538] sm:$0xff]
    %v258 = vld [vmem:[#allocation5 + $0x540] sm:$0xff]
    %v259 = vld [vmem:[#allocation5 + $0x548] sm:$0xff]
    %v260 = vld [vmem:[#allocation5 + $0x550] sm:$0xff]
    %v261 = vld [vmem:[#allocation5 + $0x558] sm:$0xff]
    %v262 = vld [vmem:[#allocation5 + $0x560] sm:$0xff]
    %v263 = vld [vmem:[#allocation5 + $0x568] sm:$0xff]
    %v264 = vld [vmem:[#allocation5 + $0x570] sm:$0xff]
    %v265 = vld [vmem:[#allocation5 + $0x578] sm:$0xff]
    %v266 = vld [vmem:[#allocation5 + $0x580] sm:$0xff]
    %v267 = vld [vmem:[#allocation5 + $0x588] sm:$0xff]
    %v268 = vld [vmem:[#allocation5 + $0x590] sm:$0xff]
    %v269 = vld [vmem:[#allocation5 + $0x598] sm:$0xff]
    %v270 = vld [vmem:[#allocation5 + $0x5a0] sm:$0xff]
    %v271 = vld [vmem:[#allocation5 + $0x5a8] sm:$0xff]
    %v272 = vld [vmem:[#allocation5 + $0x5b0] sm:$0xff]
    %v273 = vld [vmem:[#allocation5 + $0x5b8] sm:$0xff]
    %v274 = vld [vmem:[#allocation5 + $0x5c0] sm:$0xff]
    %v275 = vld [vmem:[#allocation5 + $0x5c8] sm:$0xff]
    %v276 = vld [vmem:[#allocation5 + $0x5d0] sm:$0xff]
    %v277 = vld [vmem:[#allocation5 + $0x5d8] sm:$0xff]
    %v278 = vld [vmem:[#allocation5 + $0x5e0] sm:$0xff]
    %v279 = vld [vmem:[#allocation5 + $0x5e8] sm:$0xff]
    %v280 = vld [vmem:[#allocation5 + $0x5f0] sm:$0xff]
    %v281 = vld [vmem:[#allocation5 + $0x5f8] sm:$0xff]
    %v282 = vld [vmem:[#allocation5 + $0x600] sm:$0xff]
    %v283 = vld [vmem:[#allocation5 + $0x608] sm:$0xff]
    %v284 = vld [vmem:[#allocation5 + $0x610] sm:$0xff]
    %v285 = vld [vmem:[#allocation5 + $0x618] sm:$0xff]
    %v286 = vld [vmem:[#allocation5 + $0x620] sm:$0xff]
    %v287 = vld [vmem:[#allocation5 + $0x628] sm:$0xff]
    %v288 = vld [vmem:[#allocation5 + $0x630] sm:$0xff]
    %v289 = vld [vmem:[#allocation5 + $0x638] sm:$0xff]
    %v290 = vld [vmem:[#allocation5 + $0x640] sm:$0xff]
    %v291 = vld [vmem:[#allocation5 + $0x648] sm:$0xff]
    %v292 = vld [vmem:[#allocation5 + $0x650] sm:$0xff]
    %v293 = vld [vmem:[#allocation5 + $0x658] sm:$0xff]
    %v294 = vld [vmem:[#allocation5 + $0x660] sm:$0xff]
    %v295 = vld [vmem:[#allocation5 + $0x668] sm:$0xff]
    %v296 = vld [vmem:[#allocation5 + $0x670] sm:$0xff]
    %v297 = vld [vmem:[#allocation5 + $0x678] sm:$0xff]
    %v298 = vld [vmem:[#allocation5 + $0x680] sm:$0xff]
    %v299 = vld [vmem:[#allocation5 + $0x688] sm:$0xff]
    %v300 = vld [vmem:[#allocation5 + $0x690] sm:$0xff]
    %v301 = vld [vmem:[#allocation5 + $0x698] sm:$0xff]
    %v302 = vld [vmem:[#allocation5 + $0x6a0] sm:$0xff]
    %v303 = vld [vmem:[#allocation5 + $0x6a8] sm:$0xff]
    %v304 = vld [vmem:[#allocation5 + $0x6b0] sm:$0xff]
    %v305 = vld [vmem:[#allocation5 + $0x6b8] sm:$0xff]
    %v306 = vld [vmem:[#allocation5 + $0x6c0] sm:$0xff]
    %v307 = vld [vmem:[#allocation5 + $0x6c8] sm:$0xff]
    %v308 = vld [vmem:[#allocation5 + $0x6d0] sm:$0xff]
    %v309 = vld [vmem:[#allocation5 + $0x6d8] sm:$0xff]
    %v310 = vld [vmem:[#allocation5 + $0x6e0] sm:$0xff]
    %v311 = vld [vmem:[#allocation5 + $0x6e8] sm:$0xff]
    %v312 = vld [vmem:[#allocation5 + $0x6f0] sm:$0xff]
    %v313 = vld [vmem:[#allocation5 + $0x6f8] sm:$0xff]
    %v314 = vld [vmem:[#allocation5 + $0x700] sm:$0xff]
    %v315 = vld [vmem:[#allocation5 + $0x708] sm:$0xff]
    %v316 = vld [vmem:[#allocation5 + $0x710] sm:$0xff]
    %v317 = vld [vmem:[#allocation5 + $0x718] sm:$0xff]
    %v318 = vld [vmem:[#allocation5 + $0x720] sm:$0xff]
    %v319 = vld [vmem:[#allocation5 + $0x728] sm:$0xff]
    %v320 = vld [vmem:[#allocation5 + $0x730] sm:$0xff]
    %v321 = vld [vmem:[#allocation5 + $0x738] sm:$0xff]
    %v322 = vld [vmem:[#allocation5 + $0x740] sm:$0xff]
    %v323 = vld [vmem:[#allocation5 + $0x748] sm:$0xff]
    %v324 = vld [vmem:[#allocation5 + $0x750] sm:$0xff]
    %v325 = vld [vmem:[#allocation5 + $0x758] sm:$0xff]
    %v326 = vld [vmem:[#allocation5 + $0x760] sm:$0xff]
    %v327 = vld [vmem:[#allocation5 + $0x768] sm:$0xff]
    %v328 = vld [vmem:[#allocation5 + $0x770] sm:$0xff]
    %v329 = vld [vmem:[#allocation5 + $0x778] sm:$0xff]
    %v330 = vld [vmem:[#allocation5 + $0x780] sm:$0xff]
    %v331 = vld [vmem:[#allocation5 + $0x788] sm:$0xff]
    %v332 = vld [vmem:[#allocation5 + $0x790] sm:$0xff]
    %v333 = vld [vmem:[#allocation5 + $0x798] sm:$0xff]
    %v334 = vld [vmem:[#allocation5 + $0x7a0] sm:$0xff]
    %v335 = vld [vmem:[#allocation5 + $0x7a8] sm:$0xff]
    %v336 = vld [vmem:[#allocation5 + $0x7b0] sm:$0xff]
    %v337 = vld [vmem:[#allocation5 + $0x7b8] sm:$0xff]
    %v338 = vld [vmem:[#allocation5 + $0x7c0] sm:$0xff]
    %v339 = vld [vmem:[#allocation5 + $0x7c8] sm:$0xff]
    %v340 = vld [vmem:[#allocation5 + $0x7d0] sm:$0xff]
    %v341 = vld [vmem:[#allocation5 + $0x7d8] sm:$0xff]
    %v342 = vld [vmem:[#allocation5 + $0x7e0] sm:$0xff]
    %v343 = vld [vmem:[#allocation5 + $0x7e8] sm:$0xff]
    %v344 = vld [vmem:[#allocation5 + $0x7f0] sm:$0xff]
    %v345 = vld [vmem:[#allocation5 + $0x7f8] sm:$0xff]
    %v346 = vld [vmem:[#allocation5 + $0x800] sm:$0xff]
    %v347 = vld [vmem:[#allocation5 + $0x808] sm:$0xff]
    %v348 = vld [vmem:[#allocation5 + $0x810] sm:$0xff]
    %v349 = vld [vmem:[#allocation5 + $0x818] sm:$0xff]
    %v350 = vld [vmem:[#allocation5 + $0x820] sm:$0xff]
    %v351 = vld [vmem:[#allocation5 + $0x828] sm:$0xff]
    %v352 = vld [vmem:[#allocation5 + $0x830] sm:$0xff]
    %v353 = vld [vmem:[#allocation5 + $0x838] sm:$0xff]
    %v354 = vld [vmem:[#allocation5 + $0x840] sm:$0xff]
    %v355 = vld [vmem:[#allocation5 + $0x848] sm:$0xff]
    %v356 = vld [vmem:[#allocation5 + $0x850] sm:$0xff]
    %v357 = vld [vmem:[#allocation5 + $0x858] sm:$0xff]
    %v358 = vld [vmem:[#allocation5 + $0x860] sm:$0xff]
    %v359 = vld [vmem:[#allocation5 + $0x868] sm:$0xff]
    %v360 = vld [vmem:[#allocation5 + $0x870] sm:$0xff]
    %v361 = vld [vmem:[#allocation5 + $0x878] sm:$0xff]
    %v362 = vld [vmem:[#allocation5 + $0x880] sm:$0xff]
    %v363 = vld [vmem:[#allocation5 + $0x888] sm:$0xff]
    %v364 = vld [vmem:[#allocation5 + $0x890] sm:$0xff]
    %v365 = vld [vmem:[#allocation5 + $0x898] sm:$0xff]
    %v366 = vld [vmem:[#allocation5 + $0x8a0] sm:$0xff]
    %v367 = vld [vmem:[#allocation5 + $0x8a8] sm:$0xff]
    %v368 = vld [vmem:[#allocation5 + $0x8b0] sm:$0xff]
    %v369 = vld [vmem:[#allocation5 + $0x8b8] sm:$0xff]
    %v370 = vld [vmem:[#allocation5 + $0x8c0] sm:$0xff]
    %v371 = vld [vmem:[#allocation5 + $0x8c8] sm:$0xff]
    %v372 = vld [vmem:[#allocation5 + $0x8d0] sm:$0xff]
    %v373 = vld [vmem:[#allocation5 + $0x8d8] sm:$0xff]
    %v374 = vld [vmem:[#allocation5 + $0x8e0] sm:$0xff]
    %v375 = vld [vmem:[#allocation5 + $0x8e8] sm:$0xff]
    %v376 = vld [vmem:[#allocation5 + $0x8f0] sm:$0xff]
    %v377 = vld [vmem:[#allocation5 + $0x8f8] sm:$0xff]
    %v378 = vld [vmem:[#allocation5 + $0x900] sm:$0xff]
    %v379 = vld [vmem:[#allocation5 + $0x908] sm:$0xff]
    %v380 = vld [vmem:[#allocation5 + $0x910] sm:$0xff]
    %v381 = vld [vmem:[#allocation5 + $0x918] sm:$0xff]
    %v382 = vld [vmem:[#allocation5 + $0x920] sm:$0xff]
    %v383 = vld [vmem:[#allocation5 + $0x928] sm:$0xff]
    %v384 = vld [vmem:[#allocation5 + $0x930] sm:$0xff]
    %v385 = vld [vmem:[#allocation5 + $0x938] sm:$0xff]
    %v386 = vld [vmem:[#allocation5 + $0x940] sm:$0xff]
    %v387 = vld [vmem:[#allocation5 + $0x948] sm:$0xff]
    %v388 = vld [vmem:[#allocation5 + $0x950] sm:$0xff]
    %v389 = vld [vmem:[#allocation5 + $0x958] sm:$0xff]
    %v390 = vld [vmem:[#allocation5 + $0x960] sm:$0xff]
    %v391 = vld [vmem:[#allocation5 + $0x968] sm:$0xff]
    %v392 = vld [vmem:[#allocation5 + $0x970] sm:$0xff]
    %v393 = vld [vmem:[#allocation5 + $0x978] sm:$0xff]
    %v394 = vld [vmem:[#allocation5 + $0x980] sm:$0xff]
    %v395 = vld [vmem:[#allocation5 + $0x988] sm:$0xff]
    %v396 = vld [vmem:[#allocation5 + $0x990] sm:$0xff]
    %v397 = vld [vmem:[#allocation5 + $0x998] sm:$0xff]
    %v398 = vld [vmem:[#allocation5 + $0x9a0] sm:$0xff]
    %v399 = vld [vmem:[#allocation5 + $0x9a8] sm:$0xff]
    %v400 = vld [vmem:[#allocation5 + $0x9b0] sm:$0xff]
    %v401 = vld [vmem:[#allocation5 + $0x9b8] sm:$0xff]
    %v402 = vld [vmem:[#allocation5 + $0x9c0] sm:$0xff]
    %v403 = vld [vmem:[#allocation5 + $0x9c8] sm:$0xff]
    %v404 = vld [vmem:[#allocation5 + $0x9d0] sm:$0xff]
    %v405 = vld [vmem:[#allocation5 + $0x9d8] sm:$0xff]
    %v406 = vld [vmem:[#allocation5 + $0x9e0] sm:$0xff]
    %v407 = vld [vmem:[#allocation5 + $0x9e8] sm:$0xff]
    %v408 = vld [vmem:[#allocation5 + $0x9f0] sm:$0xff]
    %v409 = vld [vmem:[#allocation5 + $0x9f8] sm:$0xff]
    %v410 = vld [vmem:[#allocation5 + $0xa00] sm:$0xff]
    %v411 = vld [vmem:[#allocation5 + $0xa08] sm:$0xff]
    %v412 = vld [vmem:[#allocation5 + $0xa10] sm:$0xff]
    %v413 = vld [vmem:[#allocation5 + $0xa18] sm:$0xff]
    %v414 = vld [vmem:[#allocation5 + $0xa20] sm:$0xff]
    %v415 = vld [vmem:[#allocation5 + $0xa28] sm:$0xff]
    %v416 = vld [vmem:[#allocation5 + $0xa30] sm:$0xff]
    %v417 = vld [vmem:[#allocation5 + $0xa38] sm:$0xff]
    %v418 = vld [vmem:[#allocation5 + $0xa40] sm:$0xff]
    %v419 = vld [vmem:[#allocation5 + $0xa48] sm:$0xff]
    %v420 = vld [vmem:[#allocation5 + $0xa50] sm:$0xff]
    %v421 = vld [vmem:[#allocation5 + $0xa58] sm:$0xff]
    %v422 = vld [vmem:[#allocation5 + $0xa60] sm:$0xff]
    %v423 = vld [vmem:[#allocation5 + $0xa68] sm:$0xff]
    %v424 = vld [vmem:[#allocation5 + $0xa70] sm:$0xff]
    %v425 = vld [vmem:[#allocation5 + $0xa78] sm:$0xff]
    %v426 = vld [vmem:[#allocation5 + $0xa80] sm:$0xff]
    %v427 = vld [vmem:[#allocation5 + $0xa88] sm:$0xff]
    %v428 = vld [vmem:[#allocation5 + $0xa90] sm:$0xff]
    %v429 = vld [vmem:[#allocation5 + $0xa98] sm:$0xff]
    %v430 = vld [vmem:[#allocation5 + $0xaa0] sm:$0xff]
    %v431 = vld [vmem:[#allocation5 + $0xaa8] sm:$0xff]
    %v432 = vld [vmem:[#allocation5 + $0xab0] sm:$0xff]
    %v433 = vld [vmem:[#allocation5 + $0xab8] sm:$0xff]
    %v434 = vld [vmem:[#allocation5 + $0xac0] sm:$0xff]
    %v435 = vld [vmem:[#allocation5 + $0xac8] sm:$0xff]
    %v436 = vld [vmem:[#allocation5 + $0xad0] sm:$0xff]
    %v437 = vld [vmem:[#allocation5 + $0xad8] sm:$0xff]
    %v438 = vld [vmem:[#allocation5 + $0xae0] sm:$0xff]
    %v439 = vld [vmem:[#allocation5 + $0xae8] sm:$0xff]
    %v440 = vld [vmem:[#allocation5 + $0xaf0] sm:$0xff]
    %v441 = vld [vmem:[#allocation5 + $0xaf8] sm:$0xff]
    %v442 = vld [vmem:[#allocation5 + $0xb00] sm:$0xff]
    %v443 = vld [vmem:[#allocation5 + $0xb08] sm:$0xff]
    %v444 = vld [vmem:[#allocation5 + $0xb10] sm:$0xff]
    %v445 = vld [vmem:[#allocation5 + $0xb18] sm:$0xff]
    %v446 = vld [vmem:[#allocation5 + $0xb20] sm:$0xff]
    %v447 = vld [vmem:[#allocation5 + $0xb28] sm:$0xff]
    %v448 = vld [vmem:[#allocation5 + $0xb30] sm:$0xff]
    %v449 = vld [vmem:[#allocation5 + $0xb38] sm:$0xff]
    %v450 = vld [vmem:[#allocation5 + $0xb40] sm:$0xff]
    %v451 = vld [vmem:[#allocation5 + $0xb48] sm:$0xff]
    %v452 = vld [vmem:[#allocation5 + $0xb50] sm:$0xff]
    %v453 = vld [vmem:[#allocation5 + $0xb58] sm:$0xff]
    %v454 = vld [vmem:[#allocation5 + $0xb60] sm:$0xff]
    %v455 = vld [vmem:[#allocation5 + $0xb68] sm:$0xff]
    %v456 = vld [vmem:[#allocation5 + $0xb70] sm:$0xff]
    %v457 = vld [vmem:[#allocation5 + $0xb78] sm:$0xff]
    %v458 = vld [vmem:[#allocation5 + $0xb80] sm:$0xff]
    %v459 = vld [vmem:[#allocation5 + $0xb88] sm:$0xff]
    %v460 = vld [vmem:[#allocation5 + $0xb90] sm:$0xff]
    %v461 = vld [vmem:[#allocation5 + $0xb98] sm:$0xff]
    %v462 = vld [vmem:[#allocation5 + $0xba0] sm:$0xff]
    %v463 = vld [vmem:[#allocation5 + $0xba8] sm:$0xff]
    %v464 = vld [vmem:[#allocation5 + $0xbb0] sm:$0xff]
    %v465 = vld [vmem:[#allocation5 + $0xbb8] sm:$0xff]
    %v466 = vld [vmem:[#allocation5 + $0xbc0] sm:$0xff]
    %v467 = vld [vmem:[#allocation5 + $0xbc8] sm:$0xff]
    %v468 = vld [vmem:[#allocation5 + $0xbd0] sm:$0xff]
    %v469 = vld [vmem:[#allocation5 + $0xbd8] sm:$0xff]
    %v470 = vld [vmem:[#allocation5 + $0xbe0] sm:$0xff]
    %v471 = vld [vmem:[#allocation5 + $0xbe8] sm:$0xff]
    %v472 = vld [vmem:[#allocation5 + $0xbf0] sm:$0xff]
    %v473 = vld [vmem:[#allocation5 + $0xbf8] sm:$0xff]
    %v474 = vld [vmem:[#allocation5 + $0xc00] sm:$0xff]
    %v475 = vld [vmem:[#allocation5 + $0xc08] sm:$0xff]
    %v476 = vld [vmem:[#allocation5 + $0xc10] sm:$0xff]
    %v477 = vld [vmem:[#allocation5 + $0xc18] sm:$0xff]
    %v478 = vld [vmem:[#allocation5 + $0xc20] sm:$0xff]
    %v479 = vld [vmem:[#allocation5 + $0xc28] sm:$0xff]
    %v480 = vld [vmem:[#allocation5 + $0xc30] sm:$0xff]
    %v481 = vld [vmem:[#allocation5 + $0xc38] sm:$0xff]
    %v482 = vld [vmem:[#allocation5 + $0xc40] sm:$0xff]
    %v483 = vld [vmem:[#allocation5 + $0xc48] sm:$0xff]
    %v484 = vld [vmem:[#allocation5 + $0xc50] sm:$0xff]
    %v485 = vld [vmem:[#allocation5 + $0xc58] sm:$0xff]
    %v486 = vld [vmem:[#allocation5 + $0xc60] sm:$0xff]
    %v487 = vld [vmem:[#allocation5 + $0xc68] sm:$0xff]
    %v488 = vld [vmem:[#allocation5 + $0xc70] sm:$0xff]
    %v489 = vld [vmem:[#allocation5 + $0xc78] sm:$0xff]
    %v490 = vld [vmem:[#allocation5 + $0xc80] sm:$0xff]
    %v491 = vld [vmem:[#allocation5 + $0xc88] sm:$0xff]
    %v492 = vld [vmem:[#allocation5 + $0xc90] sm:$0xff]
    %v493 = vld [vmem:[#allocation5 + $0xc98] sm:$0xff]
    %v494 = vld [vmem:[#allocation5 + $0xca0] sm:$0xff]
    %v495 = vld [vmem:[#allocation5 + $0xca8] sm:$0xff]
    %v496 = vld [vmem:[#allocation5 + $0xcb0] sm:$0xff]
    %v497 = vld [vmem:[#allocation5 + $0xcb8] sm:$0xff]
    %v498 = vld [vmem:[#allocation5 + $0xcc0] sm:$0xff]
    %v499 = vld [vmem:[#allocation5 + $0xcc8] sm:$0xff]
    %v500 = vld [vmem:[#allocation5 + $0xcd0] sm:$0xff]
    %v501 = vld [vmem:[#allocation5 + $0xcd8] sm:$0xff]
    %v502 = vld [vmem:[#allocation5 + $0xce0] sm:$0xff]
    %v503 = vld [vmem:[#allocation5 + $0xce8] sm:$0xff]
    %v504 = vld [vmem:[#allocation5 + $0xcf0] sm:$0xff]
    %v505 = vld [vmem:[#allocation5 + $0xcf8] sm:$0xff]
    %v506 = vld [vmem:[#allocation5 + $0xd00] sm:$0xff]
    %v507 = vld [vmem:[#allocation5 + $0xd08] sm:$0xff]
    %v508 = vld [vmem:[#allocation5 + $0xd10] sm:$0xff]
    %v509 = vld [vmem:[#allocation5 + $0xd18] sm:$0xff]
    %v510 = vld [vmem:[#allocation5 + $0xd20] sm:$0xff]
    %v511 = vld [vmem:[#allocation5 + $0xd28] sm:$0xff]
    %v512 = vld [vmem:[#allocation5 + $0xd30] sm:$0xff]
    %v513 = vld [vmem:[#allocation5 + $0xd38] sm:$0xff]
    %v514 = vld [vmem:[#allocation5 + $0xd40] sm:$0xff]
    %v515 = vld [vmem:[#allocation5 + $0xd48] sm:$0xff]
    %v516 = vld [vmem:[#allocation5 + $0xd50] sm:$0xff]
    %v517 = vld [vmem:[#allocation5 + $0xd58] sm:$0xff]
    %v518 = vld [vmem:[#allocation5 + $0xd60] sm:$0xff]
    %v519 = vld [vmem:[#allocation5 + $0xd68] sm:$0xff]
    %v520 = vld [vmem:[#allocation5 + $0xd70] sm:$0xff]
    %v521 = vld [vmem:[#allocation5 + $0xd78] sm:$0xff]
    %v522 = vld [vmem:[#allocation5 + $0xd80] sm:$0xff]
    %v523 = vld [vmem:[#allocation5 + $0xd88] sm:$0xff]
    %v524 = vld [vmem:[#allocation5 + $0xd90] sm:$0xff]
    %v525 = vld [vmem:[#allocation5 + $0xd98] sm:$0xff]
    %v526 = vld [vmem:[#allocation5 + $0xda0] sm:$0xff]
    %v527 = vld [vmem:[#allocation5 + $0xda8] sm:$0xff]
    %v528 = vld [vmem:[#allocation5 + $0xdb0] sm:$0xff]
    %v529 = vld [vmem:[#allocation5 + $0xdb8] sm:$0xff]
    %v530 = vld [vmem:[#allocation5 + $0xdc0] sm:$0xff]
    %v531 = vld [vmem:[#allocation5 + $0xdc8] sm:$0xff]
    %v532 = vld [vmem:[#allocation5 + $0xdd0] sm:$0xff]
    %v533 = vld [vmem:[#allocation5 + $0xdd8] sm:$0xff]
    %v534 = vld [vmem:[#allocation5 + $0xde0] sm:$0xff]
    %v535 = vld [vmem:[#allocation5 + $0xde8] sm:$0xff]
    %v536 = vld [vmem:[#allocation5 + $0xdf0] sm:$0xff]
    %v537 = vld [vmem:[#allocation5 + $0xdf8] sm:$0xff]
    %v538 = vld [vmem:[#allocation5 + $0xe00] sm:$0xff]
    %v539 = vld [vmem:[#allocation5 + $0xe08] sm:$0xff]
    %v540 = vld [vmem:[#allocation5 + $0xe10] sm:$0xff]
    %v541 = vld [vmem:[#allocation5 + $0xe18] sm:$0xff]
    %v542 = vld [vmem:[#allocation5 + $0xe20] sm:$0xff]
    %v543 = vld [vmem:[#allocation5 + $0xe28] sm:$0xff]
    %v544 = vld [vmem:[#allocation5 + $0xe30] sm:$0xff]
    %v545 = vld [vmem:[#allocation5 + $0xe38] sm:$0xff]
    %v546 = vld [vmem:[#allocation5 + $0xe40] sm:$0xff]
    %v547 = vld [vmem:[#allocation5 + $0xe48] sm:$0xff]
    %v548 = vld [vmem:[#allocation5 + $0xe50] sm:$0xff]
    %v549 = vld [vmem:[#allocation5 + $0xe58] sm:$0xff]
    %v550 = vld [vmem:[#allocation5 + $0xe60] sm:$0xff]
    %v551 = vld [vmem:[#allocation5 + $0xe68] sm:$0xff]
    %v552 = vld [vmem:[#allocation5 + $0xe70] sm:$0xff]
    %v553 = vld [vmem:[#allocation5 + $0xe78] sm:$0xff]
    %v554 = vld [vmem:[#allocation5 + $0xe80] sm:$0xff]
    %v555 = vld [vmem:[#allocation5 + $0xe88] sm:$0xff]
    %v556 = vld [vmem:[#allocation5 + $0xe90] sm:$0xff]
    %v557 = vld [vmem:[#allocation5 + $0xe98] sm:$0xff]
    %v558 = vld [vmem:[#allocation5 + $0xea0] sm:$0xff]
    %v559 = vld [vmem:[#allocation5 + $0xea8] sm:$0xff]
    %v560 = vld [vmem:[#allocation5 + $0xeb0] sm:$0xff]
    %v561 = vld [vmem:[#allocation5 + $0xeb8] sm:$0xff]
    %v562 = vld [vmem:[#allocation5 + $0xec0] sm:$0xff]
    %v563 = vld [vmem:[#allocation5 + $0xec8] sm:$0xff]
    %v564 = vld [vmem:[#allocation5 + $0xed0] sm:$0xff]
    %v565 = vld [vmem:[#allocation5 + $0xed8] sm:$0xff]
    %v566 = vld [vmem:[#allocation5 + $0xee0] sm:$0xff]
    %v567 = vld [vmem:[#allocation5 + $0xee8] sm:$0xff]
    %v568 = vld [vmem:[#allocation5 + $0xef0] sm:$0xff]
    %v569 = vld [vmem:[#allocation5 + $0xef8] sm:$0xff]
    %v570 = vld [vmem:[#allocation5 + $0xf00] sm:$0xff]
    %v571 = vld [vmem:[#allocation5 + $0xf08] sm:$0xff]
    %v572 = vld [vmem:[#allocation5 + $0xf10] sm:$0xff]
    %v573 = vld [vmem:[#allocation5 + $0xf18] sm:$0xff]
    %v574 = vld [vmem:[#allocation5 + $0xf20] sm:$0xff]
    %v575 = vld [vmem:[#allocation5 + $0xf28] sm:$0xff]
    %v576 = vld [vmem:[#allocation5 + $0xf30] sm:$0xff]
    %v577 = vld [vmem:[#allocation5 + $0xf38] sm:$0xff]
    %v578 = vld [vmem:[#allocation5 + $0xf40] sm:$0xff]
    %v579 = vld [vmem:[#allocation5 + $0xf48] sm:$0xff]
    %v580 = vld [vmem:[#allocation5 + $0xf50] sm:$0xff]
    %v581 = vld [vmem:[#allocation5 + $0xf58] sm:$0xff]
    %v582 = vld [vmem:[#allocation5 + $0xf60] sm:$0xff]
    %v583 = vld [vmem:[#allocation5 + $0xf68] sm:$0xff]
    %v584 = vld [vmem:[#allocation5 + $0xf70] sm:$0xff]
    %v585 = vld [vmem:[#allocation5 + $0xf78] sm:$0xff]
    %v586 = vld [vmem:[#allocation5 + $0xf80] sm:$0xff]
    %v587 = vld [vmem:[#allocation5 + $0xf88] sm:$0xff]
    %v588 = vld [vmem:[#allocation5 + $0xf90] sm:$0xff]
    %v589 = vld [vmem:[#allocation5 + $0xf98] sm:$0xff]
    %v590 = vld [vmem:[#allocation5 + $0xfa0] sm:$0xff]
    %v591 = vld [vmem:[#allocation5 + $0xfa8] sm:$0xff]
    %v592 = vld [vmem:[#allocation5 + $0xfb0] sm:$0xff]
    %v593 = vld [vmem:[#allocation5 + $0xfb8] sm:$0xff]
    %v594 = vld [vmem:[#allocation5 + $0xfc0] sm:$0xff]
    %v595 = vld [vmem:[#allocation5 + $0xfc8] sm:$0xff]
    %v596 = vld [vmem:[#allocation5 + $0xfd0] sm:$0xff]
    %v597 = vld [vmem:[#allocation5 + $0xfd8] sm:$0xff]
    %v598 = vld [vmem:[#allocation5 + $0xfe0] sm:$0xff]
    %v599 = vld [vmem:[#allocation5 + $0xfe8] sm:$0xff]
    %v600 = vld [vmem:[#allocation5 + $0xff0] sm:$0xff]
    %v601 = vld [vmem:[#allocation5 + $0xff8] sm:$0xff]
    %v602 = vld [vmem:[#allocation5 + $0x1000] sm:$0xff]
    %v603 = vld [vmem:[#allocation5 + $0x1008] sm:$0xff]
    %v604 = vld [vmem:[#allocation5 + $0x1010] sm:$0xff]
    %v605 = vld [vmem:[#allocation5 + $0x1018] sm:$0xff]
    %v606 = vld [vmem:[#allocation5 + $0x1020] sm:$0xff]
    %v607 = vld [vmem:[#allocation5 + $0x1028] sm:$0xff]
    %v608 = vld [vmem:[#allocation5 + $0x1030] sm:$0xff]
    %v609 = vld [vmem:[#allocation5 + $0x1038] sm:$0xff]
    %v610 = vld [vmem:[#allocation5 + $0x1040] sm:$0xff]
    %v611 = vld [vmem:[#allocation5 + $0x1048] sm:$0xff]
    %v612 = vld [vmem:[#allocation5 + $0x1050] sm:$0xff]
    %v613 = vld [vmem:[#allocation5 + $0x1058] sm:$0xff]
    %v614 = vld [vmem:[#allocation5 + $0x1060] sm:$0xff]
    %v615 = vld [vmem:[#allocation5 + $0x1068] sm:$0xff]
    %v616 = vld [vmem:[#allocation5 + $0x1070] sm:$0xff]
    %v617 = vld [vmem:[#allocation5 + $0x1078] sm:$0xff]
    %v618 = vld [vmem:[#allocation5 + $0x1080] sm:$0xff]
    %v619 = vld [vmem:[#allocation5 + $0x1088] sm:$0xff]
    %v620 = vld [vmem:[#allocation5 + $0x1090] sm:$0xff]
    %v621 = vld [vmem:[#allocation5 + $0x1098] sm:$0xff]
    %v622 = vld [vmem:[#allocation5 + $0x10a0] sm:$0xff]
    %v623 = vld [vmem:[#allocation5 + $0x10a8] sm:$0xff]
    %v624 = vld [vmem:[#allocation5 + $0x10b0] sm:$0xff]
    %v625 = vld [vmem:[#allocation5 + $0x10b8] sm:$0xff]
    %v626 = vld [vmem:[#allocation5 + $0x10c0] sm:$0xff]
    %v627 = vld [vmem:[#allocation5 + $0x10c8] sm:$0xff]
    %v628 = vld [vmem:[#allocation5 + $0x10d0] sm:$0xff]
    %v629 = vld [vmem:[#allocation5 + $0x10d8] sm:$0xff]
    %v630 = vld [vmem:[#allocation5 + $0x10e0] sm:$0xff]
    %v631 = vld [vmem:[#allocation5 + $0x10e8] sm:$0xff]
    %v632 = vld [vmem:[#allocation5 + $0x10f0] sm:$0xff]
    %v633 = vld [vmem:[#allocation5 + $0x10f8] sm:$0xff]
    %v634 = vld [vmem:[#allocation5 + $0x1100] sm:$0xff]
    %v635 = vld [vmem:[#allocation5 + $0x1108] sm:$0xff]
    %v636 = vld [vmem:[#allocation5 + $0x1110] sm:$0xff]
    %v637 = vld [vmem:[#allocation5 + $0x1118] sm:$0xff]
    %v638 = vld [vmem:[#allocation5 + $0x1120] sm:$0xff]
    %v639 = vld [vmem:[#allocation5 + $0x1128] sm:$0xff]
    %v640 = vld [vmem:[#allocation5 + $0x1130] sm:$0xff]
    %v641 = vld [vmem:[#allocation5 + $0x1138] sm:$0xff]
    %v642 = vld [vmem:[#allocation5 + $0x1140] sm:$0xff]
    %v643 = vld [vmem:[#allocation5 + $0x1148] sm:$0xff]
    %v644 = vld [vmem:[#allocation5 + $0x1150] sm:$0xff]
    %v645 = vld [vmem:[#allocation5 + $0x1158] sm:$0xff]
    %v646 = vld [vmem:[#allocation5 + $0x1160] sm:$0xff]
    %v647 = vld [vmem:[#allocation5 + $0x1168] sm:$0xff]
    %v648 = vld [vmem:[#allocation5 + $0x1170] sm:$0xff]
    %v649 = vld [vmem:[#allocation5 + $0x1178] sm:$0xff]
    %v650 = vld [vmem:[#allocation5 + $0x1180] sm:$0xff]
    %v651 = vld [vmem:[#allocation5 + $0x1188] sm:$0xff]
    %v652 = vld [vmem:[#allocation5 + $0x1190] sm:$0xff]
    %v653 = vld [vmem:[#allocation5 + $0x1198] sm:$0xff]
    %v654 = vld [vmem:[#allocation5 + $0x11a0] sm:$0xff]
    %v655 = vld [vmem:[#allocation5 + $0x11a8] sm:$0xff]
    %v656 = vld [vmem:[#allocation5 + $0x11b0] sm:$0xff]
    %v657 = vld [vmem:[#allocation5 + $0x11b8] sm:$0xff]
    %v658 = vld [vmem:[#allocation5 + $0x11c0] sm:$0xff]
    %v659 = vld [vmem:[#allocation5 + $0x11c8] sm:$0xff]
    %v660 = vld [vmem:[#allocation5 + $0x11d0] sm:$0xff]
    %v661 = vld [vmem:[#allocation5 + $0x11d8] sm:$0xff]
    %v662 = vld [vmem:[#allocation5 + $0x11e0] sm:$0xff]
    %v663 = vld [vmem:[#allocation5 + $0x11e8] sm:$0xff]
    %v664 = vld [vmem:[#allocation5 + $0x11f0] sm:$0xff]
    %v665 = vld [vmem:[#allocation5 + $0x11f8] sm:$0xff]
    %v666 = vld [vmem:[#allocation5 + $0x1200] sm:$0xff]
    %v667 = vld [vmem:[#allocation5 + $0x1208] sm:$0xff]
    %v668 = vld [vmem:[#allocation5 + $0x1210] sm:$0xff]
    %v669 = vld [vmem:[#allocation5 + $0x1218] sm:$0xff]
    %v670 = vld [vmem:[#allocation5 + $0x1220] sm:$0xff]
    %v671 = vld [vmem:[#allocation5 + $0x1228] sm:$0xff]
    %v672 = vld [vmem:[#allocation5 + $0x1230] sm:$0xff]
    %v673 = vld [vmem:[#allocation5 + $0x1238] sm:$0xff]
    %v674 = vld [vmem:[#allocation5 + $0x1240] sm:$0xff]
    %v675 = vld [vmem:[#allocation5 + $0x1248] sm:$0xff]
    %v676 = vld [vmem:[#allocation5 + $0x1250] sm:$0xff]
    %v677 = vld [vmem:[#allocation5 + $0x1258] sm:$0xff]
    %v678 = vld [vmem:[#allocation5 + $0x1260] sm:$0xff]
    %v679 = vld [vmem:[#allocation5 + $0x1268] sm:$0xff]
    %v680 = vld [vmem:[#allocation5 + $0x1270] sm:$0xff]
    %v681 = vld [vmem:[#allocation5 + $0x1278] sm:$0xff]
    %v682 = vld [vmem:[#allocation5 + $0x1280] sm:$0xff]
    %v683 = vld [vmem:[#allocation5 + $0x1288] sm:$0xff]
    %v684 = vld [vmem:[#allocation5 + $0x1290] sm:$0xff]
    %v685 = vld [vmem:[#allocation5 + $0x1298] sm:$0xff]
    %v686 = vld [vmem:[#allocation5 + $0x12a0] sm:$0xff]
    %v687 = vld [vmem:[#allocation5 + $0x12a8] sm:$0xff]
    %v688 = vld [vmem:[#allocation5 + $0x12b0] sm:$0xff]
    %v689 = vld [vmem:[#allocation5 + $0x12b8] sm:$0xff]
    %v690 = vld [vmem:[#allocation5 + $0x12c0] sm:$0xff]
    %v691 = vld [vmem:[#allocation5 + $0x12c8] sm:$0xff]
    %v692 = vld [vmem:[#allocation5 + $0x12d0] sm:$0xff]
    %v693 = vld [vmem:[#allocation5 + $0x12d8] sm:$0xff]
    %v694 = vld [vmem:[#allocation5 + $0x12e0] sm:$0xff]
    %v695 = vld [vmem:[#allocation5 + $0x12e8] sm:$0xff]
    %v696 = vld [vmem:[#allocation5 + $0x12f0] sm:$0xff]
    %v697 = vld [vmem:[#allocation5 + $0x12f8] sm:$0xff]
    %v698 = vld [vmem:[#allocation5 + $0x1300] sm:$0xff]
    %v699 = vld [vmem:[#allocation5 + $0x1308] sm:$0xff]
    %v700 = vld [vmem:[#allocation5 + $0x1310] sm:$0xff]
    %v701 = vld [vmem:[#allocation5 + $0x1318] sm:$0xff]
    %v702 = vld [vmem:[#allocation5 + $0x1320] sm:$0xff]
    %v703 = vld [vmem:[#allocation5 + $0x1328] sm:$0xff]
    %v704 = vld [vmem:[#allocation5 + $0x1330] sm:$0xff]
    %v705 = vld [vmem:[#allocation5 + $0x1338] sm:$0xff]
    %v706 = vld [vmem:[#allocation5 + $0x1340] sm:$0xff]
    %v707 = vld [vmem:[#allocation5 + $0x1348] sm:$0xff]
    %v708 = vld [vmem:[#allocation5 + $0x1350] sm:$0xff]
    %v709 = vld [vmem:[#allocation5 + $0x1358] sm:$0xff]
    %v710 = vld [vmem:[#allocation5 + $0x1360] sm:$0xff]
    %v711 = vld [vmem:[#allocation5 + $0x1368] sm:$0xff]
    %v712 = vld [vmem:[#allocation5 + $0x1370] sm:$0xff]
    %v713 = vld [vmem:[#allocation5 + $0x1378] sm:$0xff]
    %v714 = vld [vmem:[#allocation5 + $0x1380] sm:$0xff]
    %v715 = vld [vmem:[#allocation5 + $0x1388] sm:$0xff]
    %v716 = vld [vmem:[#allocation5 + $0x1390] sm:$0xff]
    %v717 = vld [vmem:[#allocation5 + $0x1398] sm:$0xff]
    %v718 = vld [vmem:[#allocation5 + $0x13a0] sm:$0xff]
    %v719 = vld [vmem:[#allocation5 + $0x13a8] sm:$0xff]
    %v720 = vld [vmem:[#allocation5 + $0x13b0] sm:$0xff]
    %v721 = vld [vmem:[#allocation5 + $0x13b8] sm:$0xff]
    %v722 = vld [vmem:[#allocation5 + $0x13c0] sm:$0xff]
    %v723 = vld [vmem:[#allocation5 + $0x13c8] sm:$0xff]
    %v724 = vld [vmem:[#allocation5 + $0x13d0] sm:$0xff]
    %v725 = vld [vmem:[#allocation5 + $0x13d8] sm:$0xff]
    %v726 = vld [vmem:[#allocation5 + $0x13e0] sm:$0xff]
    %v727 = vld [vmem:[#allocation5 + $0x13e8] sm:$0xff]
    %v728 = vld [vmem:[#allocation5 + $0x13f0] sm:$0xff]
    %v729 = vld [vmem:[#allocation5 + $0x13f8] sm:$0xff]
    %v730 = vld [vmem:[#allocation5 + $0x1400] sm:$0xff]
    %v731 = vld [vmem:[#allocation5 + $0x1408] sm:$0xff]
    %v732 = vld [vmem:[#allocation5 + $0x1410] sm:$0xff]
    %v733 = vld [vmem:[#allocation5 + $0x1418] sm:$0xff]
    %v734 = vld [vmem:[#allocation5 + $0x1420] sm:$0xff]
    %v735 = vld [vmem:[#allocation5 + $0x1428] sm:$0xff]
    %v736 = vld [vmem:[#allocation5 + $0x1430] sm:$0xff]
    %v737 = vld [vmem:[#allocation5 + $0x1438] sm:$0xff]
    %v738 = vld [vmem:[#allocation5 + $0x1440] sm:$0xff]
    %v739 = vld [vmem:[#allocation5 + $0x1448] sm:$0xff]
    %v740 = vld [vmem:[#allocation5 + $0x1450] sm:$0xff]
    %v741 = vld [vmem:[#allocation5 + $0x1458] sm:$0xff]
    %v742 = vld [vmem:[#allocation5 + $0x1460] sm:$0xff]
    %v743 = vld [vmem:[#allocation5 + $0x1468] sm:$0xff]
    %v744 = vld [vmem:[#allocation5 + $0x1470] sm:$0xff]
    %v745 = vld [vmem:[#allocation5 + $0x1478] sm:$0xff]
    %v746 = vld [vmem:[#allocation5 + $0x1480] sm:$0xff]
    %v747 = vld [vmem:[#allocation5 + $0x1488] sm:$0xff]
    %v748 = vld [vmem:[#allocation5 + $0x1490] sm:$0xff]
    %v749 = vld [vmem:[#allocation5 + $0x1498] sm:$0xff]
    %v750 = vld [vmem:[#allocation5 + $0x14a0] sm:$0xff]
    %v751 = vld [vmem:[#allocation5 + $0x14a8] sm:$0xff]
    %v752 = vld [vmem:[#allocation5 + $0x14b0] sm:$0xff]
    %v753 = vld [vmem:[#allocation5 + $0x14b8] sm:$0xff]
    %v754 = vld [vmem:[#allocation5 + $0x14c0] sm:$0xff]
    %v755 = vld [vmem:[#allocation5 + $0x14c8] sm:$0xff]
    %v756 = vld [vmem:[#allocation5 + $0x14d0] sm:$0xff]
    %v757 = vld [vmem:[#allocation5 + $0x14d8] sm:$0xff]
    %v758 = vld [vmem:[#allocation5 + $0x14e0] sm:$0xff]
    %v759 = vld [vmem:[#allocation5 + $0x14e8] sm:$0xff]
    %v760 = vld [vmem:[#allocation5 + $0x14f0] sm:$0xff]
    %v761 = vld [vmem:[#allocation5 + $0x14f8] sm:$0xff]
    %v762 = vld [vmem:[#allocation5 + $0x1500] sm:$0xff]
    %v763 = vld [vmem:[#allocation5 + $0x1508] sm:$0xff]
    %v764 = vld [vmem:[#allocation5 + $0x1510] sm:$0xff]
    %v765 = vld [vmem:[#allocation5 + $0x1518] sm:$0xff]
    %v766 = vld [vmem:[#allocation5 + $0x1520] sm:$0xff]
    %v767 = vld [vmem:[#allocation5 + $0x1528] sm:$0xff]
    %v768 = vld [vmem:[#allocation5 + $0x1530] sm:$0xff]
    %v769 = vld [vmem:[#allocation5 + $0x1538] sm:$0xff]
    %v770 = vld [vmem:[#allocation5 + $0x1540] sm:$0xff]
    %v771 = vld [vmem:[#allocation5 + $0x1548] sm:$0xff]
    %v772 = vld [vmem:[#allocation5 + $0x1550] sm:$0xff]
    %v773 = vld [vmem:[#allocation5 + $0x1558] sm:$0xff]
    %v774 = vld [vmem:[#allocation5 + $0x1560] sm:$0xff]
    %v775 = vld [vmem:[#allocation5 + $0x1568] sm:$0xff]
    %v776 = vld [vmem:[#allocation5 + $0x1570] sm:$0xff]
    %v777 = vld [vmem:[#allocation5 + $0x1578] sm:$0xff]
    %v778 = vld [vmem:[#allocation5 + $0x1580] sm:$0xff]
    %v779 = vld [vmem:[#allocation5 + $0x1588] sm:$0xff]
    %v780 = vld [vmem:[#allocation5 + $0x1590] sm:$0xff]
    %v781 = vld [vmem:[#allocation5 + $0x1598] sm:$0xff]
    %v782 = vld [vmem:[#allocation5 + $0x15a0] sm:$0xff]
    %v783 = vld [vmem:[#allocation5 + $0x15a8] sm:$0xff]
    %v784 = vld [vmem:[#allocation5 + $0x15b0] sm:$0xff]
    %v785 = vld [vmem:[#allocation5 + $0x15b8] sm:$0xff]
    %v786 = vld [vmem:[#allocation5 + $0x15c0] sm:$0xff]
    %v787 = vld [vmem:[#allocation5 + $0x15c8] sm:$0xff]
    %v788 = vld [vmem:[#allocation5 + $0x15d0] sm:$0xff]
    %v789 = vld [vmem:[#allocation5 + $0x15d8] sm:$0xff]
    %v790 = vld [vmem:[#allocation5 + $0x15e0] sm:$0xff]
    %v791 = vld [vmem:[#allocation5 + $0x15e8] sm:$0xff]
    %v792 = vld [vmem:[#allocation5 + $0x15f0] sm:$0xff]
    %v793 = vld [vmem:[#allocation5 + $0x15f8] sm:$0xff]
    %v794 = vld [vmem:[#allocation5 + $0x1600] sm:$0xff]
    %v795 = vld [vmem:[#allocation5 + $0x1608] sm:$0xff]
    %v796 = vld [vmem:[#allocation5 + $0x1610] sm:$0xff]
    %v797 = vld [vmem:[#allocation5 + $0x1618] sm:$0xff]
    %v798 = vld [vmem:[#allocation5 + $0x1620] sm:$0xff]
    %v799 = vld [vmem:[#allocation5 + $0x1628] sm:$0xff]
    %v800 = vld [vmem:[#allocation5 + $0x1630] sm:$0xff]
    %v801 = vld [vmem:[#allocation5 + $0x1638] sm:$0xff]
    %v802 = vld [vmem:[#allocation5 + $0x1640] sm:$0xff]
    %v803 = vld [vmem:[#allocation5 + $0x1648] sm:$0xff]
    %v804 = vld [vmem:[#allocation5 + $0x1650] sm:$0xff]
    %v805 = vld [vmem:[#allocation5 + $0x1658] sm:$0xff]
    %v806 = vld [vmem:[#allocation5 + $0x1660] sm:$0xff]
    %v807 = vld [vmem:[#allocation5 + $0x1668] sm:$0xff]
    %v808 = vld [vmem:[#allocation5 + $0x1670] sm:$0xff]
    %v809 = vld [vmem:[#allocation5 + $0x1678] sm:$0xff]
    %v810 = vld [vmem:[#allocation5 + $0x1680] sm:$0xff]
    %v811 = vld [vmem:[#allocation5 + $0x1688] sm:$0xff]
    %v812 = vld [vmem:[#allocation5 + $0x1690] sm:$0xff]
    %v813 = vld [vmem:[#allocation5 + $0x1698] sm:$0xff]
    %v814 = vld [vmem:[#allocation5 + $0x16a0] sm:$0xff]
    %v815 = vld [vmem:[#allocation5 + $0x16a8] sm:$0xff]
    %v816 = vld [vmem:[#allocation5 + $0x16b0] sm:$0xff]
    %v817 = vld [vmem:[#allocation5 + $0x16b8] sm:$0xff]
    %v818 = vld [vmem:[#allocation5 + $0x16c0] sm:$0xff]
    %v819 = vld [vmem:[#allocation5 + $0x16c8] sm:$0xff]
    %v820 = vld [vmem:[#allocation5 + $0x16d0] sm:$0xff]
    %v821 = vld [vmem:[#allocation5 + $0x16d8] sm:$0xff]
    %v822 = vld [vmem:[#allocation5 + $0x16e0] sm:$0xff]
    %v823 = vld [vmem:[#allocation5 + $0x16e8] sm:$0xff]
    %v824 = vld [vmem:[#allocation5 + $0x16f0] sm:$0xff]
    %v825 = vld [vmem:[#allocation5 + $0x16f8] sm:$0xff]
    %v826 = vld [vmem:[#allocation5 + $0x1700] sm:$0xff]
    %v827 = vld [vmem:[#allocation5 + $0x1708] sm:$0xff]
    %v828 = vld [vmem:[#allocation5 + $0x1710] sm:$0xff]
    %v829 = vld [vmem:[#allocation5 + $0x1718] sm:$0xff]
    %v830 = vld [vmem:[#allocation5 + $0x1720] sm:$0xff]
    %v831 = vld [vmem:[#allocation5 + $0x1728] sm:$0xff]
    %v832 = vld [vmem:[#allocation5 + $0x1730] sm:$0xff]
    %v833 = vld [vmem:[#allocation5 + $0x1738] sm:$0xff]
    %v834 = vld [vmem:[#allocation5 + $0x1740] sm:$0xff]
    %v835 = vld [vmem:[#allocation5 + $0x1748] sm:$0xff]
    %v836 = vld [vmem:[#allocation5 + $0x1750] sm:$0xff]
    %v837 = vld [vmem:[#allocation5 + $0x1758] sm:$0xff]
    %v838 = vld [vmem:[#allocation5 + $0x1760] sm:$0xff]
    %v839 = vld [vmem:[#allocation5 + $0x1768] sm:$0xff]
    %v840 = vld [vmem:[#allocation5 + $0x1770] sm:$0xff]
    %v841 = vld [vmem:[#allocation5 + $0x1778] sm:$0xff]
    %v842 = vld [vmem:[#allocation5 + $0x1780] sm:$0xff]
    %v843 = vld [vmem:[#allocation5 + $0x1788] sm:$0xff]
    %v844 = vld [vmem:[#allocation5 + $0x1790] sm:$0xff]
    %v845 = vld [vmem:[#allocation5 + $0x1798] sm:$0xff]
    %v846 = vld [vmem:[#allocation5 + $0x17a0] sm:$0xff]
    %v847 = vld [vmem:[#allocation5 + $0x17a8] sm:$0xff]
    %v848 = vld [vmem:[#allocation5 + $0x17b0] sm:$0xff]
    %v849 = vld [vmem:[#allocation5 + $0x17b8] sm:$0xff]
    %v850 = vld [vmem:[#allocation5 + $0x17c0] sm:$0xff]
    %v851 = vld [vmem:[#allocation5 + $0x17c8] sm:$0xff]
    %v852 = vld [vmem:[#allocation5 + $0x17d0] sm:$0xff]
    %v853 = vld [vmem:[#allocation5 + $0x17d8] sm:$0xff]
    %v854 = vld [vmem:[#allocation5 + $0x17e0] sm:$0xff]
    %v855 = vld [vmem:[#allocation5 + $0x17e8] sm:$0xff]
    %v856 = vld [vmem:[#allocation5 + $0x17f0] sm:$0xff]
    %v857 = vld [vmem:[#allocation5 + $0x17f8] sm:$0xff]
    %v858 = vld [vmem:[#allocation5 + $0x1800] sm:$0xff]
    %v859 = vld [vmem:[#allocation5 + $0x1808] sm:$0xff]
    %v860 = vld [vmem:[#allocation5 + $0x1810] sm:$0xff]
    %v861 = vld [vmem:[#allocation5 + $0x1818] sm:$0xff]
    %v862 = vld [vmem:[#allocation5 + $0x1820] sm:$0xff]
    %v863 = vld [vmem:[#allocation5 + $0x1828] sm:$0xff]
    %v864 = vld [vmem:[#allocation5 + $0x1830] sm:$0xff]
    %v865 = vld [vmem:[#allocation5 + $0x1838] sm:$0xff]
    %v866 = vld [vmem:[#allocation5 + $0x1840] sm:$0xff]
    %v867 = vld [vmem:[#allocation5 + $0x1848] sm:$0xff]
    %v868 = vld [vmem:[#allocation5 + $0x1850] sm:$0xff]
    %v869 = vld [vmem:[#allocation5 + $0x1858] sm:$0xff]
    %v870 = vld [vmem:[#allocation5 + $0x1860] sm:$0xff]
    %v871 = vld [vmem:[#allocation5 + $0x1868] sm:$0xff]
    %v872 = vld [vmem:[#allocation5 + $0x1870] sm:$0xff]
    %v873 = vld [vmem:[#allocation5 + $0x1878] sm:$0xff]
    %v874 = vld [vmem:[#allocation7] sm:$0xff]
    %v876 = vlaneseq
    %v877 = vshrl.u32 %v876, 7
    %v878 = vsub.s32 0, %v877
    %v879 = vrot.slane %v874, %v878
    %v880 = vlaneseq
    %v881 = vshrl.u32 %v880, 7
    %v882 = vsub.s32 1, %v881
    %v883 = vrot.slane %v874, %v882
    %v884 = vlaneseq
    %v885 = vshrl.u32 %v884, 7
    %v886 = vsub.s32 2, %v885
    %v887 = vrot.slane %v874, %v886
    %v888 = vlaneseq
    %v889 = vshrl.u32 %v888, 7
    %v890 = vsub.s32 3, %v889
    %v891 = vrot.slane %v874, %v890
    %v892 = vlaneseq
    %v893 = vshrl.u32 %v892, 7
    %v894 = vsub.s32 4, %v893
    %v895 = vrot.slane %v874, %v894
    %v896 = vlaneseq
    %v897 = vshrl.u32 %v896, 7
    %v898 = vsub.s32 5, %v897
    %v899 = vrot.slane %v874, %v898
    %v900 = vlaneseq
    %v901 = vshrl.u32 %v900, 7
    %v902 = vsub.s32 6, %v901
    %v903 = vrot.slane %v874, %v902
    %911 = vmatprep.subr.mxu0 %v196
    %912 = vmatpush1.msra.mxu0 %v195
    %913 = vmatprep.subr.mxu0 %v189
    %914 = vmatpush1.msra.mxu0 %v188
    %915 = vmatprep.subr.mxu0 %v182
    %916 = vmatpush1.msra.mxu0 %v181
    %917 = vmatprep.subr.mxu0 %v175
    %918 = vmatpush1.msra.mxu0 %v174
    %919 = vmatprep.subr.mxu0 %v168
    %920 = vmatpush1.msra.mxu0 %v167
    %921 = vmatprep.subr.mxu0 %v161
    %922 = vmatpush1.msra.mxu0 %v160
    %923 = vmatprep.subr.mxu0 %v154
    %924 = vmatpush1.msra.mxu0 %v153
    %925 = vmatprep.subr.mxu0 %v147
    %926 = vmatpush1.msra.mxu0 %v146
    %927 = vmatprep.subr.mxu0 %v140
    %928 = vmatpush1.msra.mxu0 %v139
    %929 = vmatprep.subr.mxu0 %v133
    %930 = vmatpush1.msra.mxu0 %v132
    %931 = vmatprep.subr.mxu0 %v126
    %932 = vmatpush1.msra.mxu0 %v125
    %933 = vmatprep.subr.mxu0 %v119
    %934 = vmatpush1.msra.mxu0 %v118
    %935 = vmatprep.subr.mxu0 %v112
    %936 = vmatpush1.msra.mxu0 %v111
    %937 = vmatprep.subr.mxu0 %v105
    %938 = vmatpush1.msra.mxu0 %v104
    %939 = vmatprep.subr.mxu0 %v98
    %940 = vmatpush1.msra.mxu0 %v97
    %941 = vmatprep.subr.mxu0 %v91
    %942 = vmatpush1.msra.mxu0 %v90
    %943 = vmatprep.subr.mxu0 %v308
    %944 = vmatpush2.msra.mxu0 %v307
    %945 = vmatprep.subr.mxu0 %v301
    %946 = vmatpush2.msra.mxu0 %v300
    %947 = vmatprep.subr.mxu0 %v294
    %948 = vmatpush2.msra.mxu0 %v293
    %949 = vmatprep.subr.mxu0 %v287
    %950 = vmatpush2.msra.mxu0 %v286
    %951 = vmatprep.subr.mxu0 %v280
    %952 = vmatpush2.msra.mxu0 %v279
    %953 = vmatprep.subr.mxu0 %v273
    %954 = vmatpush2.msra.mxu0 %v272
    %955 = vmatprep.subr.mxu0 %v266
    %956 = vmatpush2.msra.mxu0 %v265
    %957 = vmatprep.subr.mxu0 %v259
    %958 = vmatpush2.msra.mxu0 %v258
    %959 = vmatprep.subr.mxu0 %v252
    %960 = vmatpush2.msra.mxu0 %v251
    %961 = vmatprep.subr.mxu0 %v245
    %962 = vmatpush2.msra.mxu0 %v244
    %963 = vmatprep.subr.mxu0 %v238
    %964 = vmatpush2.msra.mxu0 %v237
    %965 = vmatprep.subr.mxu0 %v231
    %966 = vmatpush2.msra.mxu0 %v230
    %967 = vmatprep.subr.mxu0 %v224
    %968 = vmatpush2.msra.mxu0 %v223
    %969 = vmatprep.subr.mxu0 %v217
    %970 = vmatpush2.msra.mxu0 %v216
    %971 = vmatprep.subr.mxu0 %v210
    %972 = vmatpush2.msra.mxu0 %v209
    %973 = vmatprep.subr.mxu0 %v203
    %974 = vmatpush2.msra.mxu0 %v202
    %975 = vmatprep.mubr.f32.mxu0 %v84
    %976 = vmatmul.mubr.f32.gmra.mxu0 %v83
    %v977 = vpop.f32.mrf.mxu0
    %v978 = vadd.f32 %v879, %v977
    %v979 = vpop.f32.mrf.mxu0
    %v980 = vadd.f32 %v883, %v979
    %981 = vdwg.mxu0
    %982 = vmatprep.subr.mxu0 %v420
    %983 = vmatpush1.msra.mxu0 %v419
    %984 = vmatprep.subr.mxu0 %v413
    %985 = vmatpush1.msra.mxu0 %v412
    %986 = vmatprep.subr.mxu0 %v406
    %987 = vmatpush1.msra.mxu0 %v405
    %988 = vmatprep.subr.mxu0 %v399
    %989 = vmatpush1.msra.mxu0 %v398
    %990 = vmatprep.subr.mxu0 %v392
    %991 = vmatpush1.msra.mxu0 %v391
    %992 = vmatprep.subr.mxu0 %v385
    %993 = vmatpush1.msra.mxu0 %v384
    %994 = vmatprep.subr.mxu0 %v378
    %995 = vmatpush1.msra.mxu0 %v377
    %996 = vmatprep.subr.mxu0 %v371
    %997 = vmatpush1.msra.mxu0 %v370
    %998 = vmatprep.subr.mxu0 %v364
    %999 = vmatpush1.msra.mxu0 %v363
    %1000 = vmatprep.subr.mxu0 %v357
    %1001 = vmatpush1.msra.mxu0 %v356
    %1002 = vmatprep.subr.mxu0 %v350
    %1003 = vmatpush1.msra.mxu0 %v349
    %1004 = vmatprep.subr.mxu0 %v343
    %1005 = vmatpush1.msra.mxu0 %v342
    %1006 = vmatprep.subr.mxu0 %v336
    %1007 = vmatpush1.msra.mxu0 %v335
    %1008 = vmatprep.subr.mxu0 %v329
    %1009 = vmatpush1.msra.mxu0 %v328
    %1010 = vmatprep.subr.mxu0 %v322
    %1011 = vmatpush1.msra.mxu0 %v321
    %1012 = vmatprep.subr.mxu0 %v315
    %1013 = vmatpush1.msra.mxu0 %v314
    %1014 = vmatprep.subr.mxu0 %v532
    %1015 = vmatpush2.msra.mxu0 %v531
    %1016 = vmatprep.subr.mxu0 %v525
    %1017 = vmatpush2.msra.mxu0 %v524
    %1018 = vmatprep.subr.mxu0 %v518
    %1019 = vmatpush2.msra.mxu0 %v517
    %1020 = vmatprep.subr.mxu0 %v511
    %1021 = vmatpush2.msra.mxu0 %v510
    %1022 = vmatprep.subr.mxu0 %v504
    %1023 = vmatpush2.msra.mxu0 %v503
    %1024 = vmatprep.subr.mxu0 %v497
    %1025 = vmatpush2.msra.mxu0 %v496
    %1026 = vmatprep.subr.mxu0 %v490
    %1027 = vmatpush2.msra.mxu0 %v489
    %1028 = vmatprep.subr.mxu0 %v483
    %1029 = vmatpush2.msra.mxu0 %v482
    %1030 = vmatprep.subr.mxu0 %v476
    %1031 = vmatpush2.msra.mxu0 %v475
    %1032 = vmatprep.subr.mxu0 %v469
    %1033 = vmatpush2.msra.mxu0 %v468
    %1034 = vmatprep.subr.mxu0 %v462
    %1035 = vmatpush2.msra.mxu0 %v461
    %1036 = vmatprep.subr.mxu0 %v455
    %1037 = vmatpush2.msra.mxu0 %v454
    %1038 = vmatprep.subr.mxu0 %v448
    %1039 = vmatpush2.msra.mxu0 %v447
    %1040 = vmatprep.subr.mxu0 %v441
    %1041 = vmatpush2.msra.mxu0 %v440
    %1042 = vmatprep.subr.mxu0 %v434
    %1043 = vmatpush2.msra.mxu0 %v433
    %1044 = vmatprep.subr.mxu0 %v427
    %1045 = vmatpush2.msra.mxu0 %v426
    %1046 = vmatprep.mubr.f32.mxu0 %v86
    %1047 = vmatmul.mubr.f32.gmra.mxu0 %v85
    %v1048 = vpop.f32.mrf.mxu0
    %v1049 = vadd.f32 %v978, %v1048
    %v1050 = vpop.f32.mrf.mxu0
    %v1051 = vadd.f32 %v980, %v1050
    %1052 = vdwg.mxu0
    %1053 = vmatprep.subr.mxu0 %v644
    %1054 = vmatpush1.msra.mxu0 %v643
    %1055 = vmatprep.subr.mxu0 %v637
    %1056 = vmatpush1.msra.mxu0 %v636
    %1057 = vmatprep.subr.mxu0 %v630
    %1058 = vmatpush1.msra.mxu0 %v629
    %1059 = vmatprep.subr.mxu0 %v623
    %1060 = vmatpush1.msra.mxu0 %v622
    %1061 = vmatprep.subr.mxu0 %v616
    %1062 = vmatpush1.msra.mxu0 %v615
    %1063 = vmatprep.subr.mxu0 %v609
    %1064 = vmatpush1.msra.mxu0 %v608
    %1065 = vmatprep.subr.mxu0 %v602
    %1066 = vmatpush1.msra.mxu0 %v601
    %1067 = vmatprep.subr.mxu0 %v595
    %1068 = vmatpush1.msra.mxu0 %v594
    %1069 = vmatprep.subr.mxu0 %v588
    %1070 = vmatpush1.msra.mxu0 %v587
    %1071 = vmatprep.subr.mxu0 %v581
    %1072 = vmatpush1.msra.mxu0 %v580
    %1073 = vmatprep.subr.mxu0 %v574
    %1074 = vmatpush1.msra.mxu0 %v573
    %1075 = vmatprep.subr.mxu0 %v567
    %1076 = vmatpush1.msra.mxu0 %v566
    %1077 = vmatprep.subr.mxu0 %v560
    %1078 = vmatpush1.msra.mxu0 %v559
    %1079 = vmatprep.subr.mxu0 %v553
    %1080 = vmatpush1.msra.mxu0 %v552
    %1081 = vmatprep.subr.mxu0 %v546
    %1082 = vmatpush1.msra.mxu0 %v545
    %1083 = vmatprep.subr.mxu0 %v539
    %1084 = vmatpush1.msra.mxu0 %v538
    %1085 = vmatprep.subr.mxu0 %v756
    %1086 = vmatpush2.msra.mxu0 %v755
    %1087 = vmatprep.subr.mxu0 %v749
    %1088 = vmatpush2.msra.mxu0 %v748
    %1089 = vmatprep.subr.mxu0 %v742
    %1090 = vmatpush2.msra.mxu0 %v741
    %1091 = vmatprep.subr.mxu0 %v735
    %1092 = vmatpush2.msra.mxu0 %v734
    %1093 = vmatprep.subr.mxu0 %v728
    %1094 = vmatpush2.msra.mxu0 %v727
    %1095 = vmatprep.subr.mxu0 %v721
    %1096 = vmatpush2.msra.mxu0 %v720
    %1097 = vmatprep.subr.mxu0 %v714
    %1098 = vmatpush2.msra.mxu0 %v713
    %1099 = vmatprep.subr.mxu0 %v707
    %1100 = vmatpush2.msra.mxu0 %v706
    %1101 = vmatprep.subr.mxu0 %v700
    %1102 = vmatpush2.msra.mxu0 %v699
    %1103 = vmatprep.subr.mxu0 %v693
    %1104 = vmatpush2.msra.mxu0 %v692
    %1105 = vmatprep.subr.mxu0 %v686
    %1106 = vmatpush2.msra.mxu0 %v685
    %1107 = vmatprep.subr.mxu0 %v679
    %1108 = vmatpush2.msra.mxu0 %v678
    %1109 = vmatprep.subr.mxu0 %v672
    %1110 = vmatpush2.msra.mxu0 %v671
    %1111 = vmatprep.subr.mxu0 %v665
    %1112 = vmatpush2.msra.mxu0 %v664
    %1113 = vmatprep.subr.mxu0 %v658
    %1114 = vmatpush2.msra.mxu0 %v657
    %1115 = vmatprep.subr.mxu0 %v651
    %1116 = vmatpush2.msra.mxu0 %v650
    %1117 = vmatprep.mubr.f32.mxu0 %v88
    %1118 = vmatmul.mubr.f32.gmra.mxu0 %v87
    %v1119 = vpop.f32.mrf.mxu0
    %v1120 = vadd.f32 %v1049, %v1119
    %v1121 = vpop.f32.mrf.mxu0
    %v1122 = vadd.f32 %v1051, %v1121
    %1123 = vdwg.mxu0
    %1124 = vmatprep.subr.mxu0 %v868
    %1125 = vmatpush1.msra.mxu0 %v867
    %1126 = vmatprep.subr.mxu0 %v861
    %1127 = vmatpush1.msra.mxu0 %v860
    %1128 = vmatprep.subr.mxu0 %v854
    %1129 = vmatpush1.msra.mxu0 %v853
    %1130 = vmatprep.subr.mxu0 %v847
    %1131 = vmatpush1.msra.mxu0 %v846
    %1132 = vmatprep.subr.mxu0 %v840
    %1133 = vmatpush1.msra.mxu0 %v839
    %1134 = vmatprep.subr.mxu0 %v833
    %1135 = vmatpush1.msra.mxu0 %v832
    %1136 = vmatprep.subr.mxu0 %v826
    %1137 = vmatpush1.msra.mxu0 %v825
    %1138 = vmatprep.subr.mxu0 %v819
    %1139 = vmatpush1.msra.mxu0 %v818
    %1140 = vmatprep.subr.mxu0 %v812
    %1141 = vmatpush1.msra.mxu0 %v811
    %1142 = vmatprep.subr.mxu0 %v805
    %1143 = vmatpush1.msra.mxu0 %v804
    %1144 = vmatprep.subr.mxu0 %v798
    %1145 = vmatpush1.msra.mxu0 %v797
    %1146 = vmatprep.subr.mxu0 %v791
    %1147 = vmatpush1.msra.mxu0 %v790
    %1148 = vmatprep.subr.mxu0 %v784
    %1149 = vmatpush1.msra.mxu0 %v783
    %1150 = vmatprep.subr.mxu0 %v777
    %1151 = vmatpush1.msra.mxu0 %v776
    %1152 = vmatprep.subr.mxu0 %v770
    %1153 = vmatpush1.msra.mxu0 %v769
    %1154 = vmatprep.subr.mxu0 %v763
    %1155 = vmatpush1.msra.mxu0 %v762
    %1156 = vmatprep.subr.mxu0 0.0
    %1157 = vmatpush2.msra.mxu0 0.0
    %1158 = vmatprep.subr.mxu0 0.0
    %1159 = vmatpush2.msra.mxu0 0.0
    %1160 = vmatprep.subr.mxu0 0.0
    %1161 = vmatpush2.msra.mxu0 0.0
    %1162 = vmatprep.subr.mxu0 0.0
    %1163 = vmatpush2.msra.mxu0 0.0
    %1164 = vmatprep.subr.mxu0 0.0
    %1165 = vmatpush2.msra.mxu0 0.0
    %1166 = vmatprep.subr.mxu0 0.0
    %1167 = vmatpush2.msra.mxu0 0.0
    %1168 = vmatprep.subr.mxu0 0.0
    %1169 = vmatpush2.msra.mxu0 0.0
    %1170 = vmatprep.subr.mxu0 0.0
    %1171 = vmatpush2.msra.mxu0 0.0
    %1172 = vmatprep.subr.mxu0 0.0
    %1173 = vmatpush2.msra.mxu0 0.0
    %1174 = vmatprep.subr.mxu0 0.0
    %1175 = vmatpush2.msra.mxu0 0.0
    %1176 = vmatprep.subr.mxu0 0.0
    %1177 = vmatpush2.msra.mxu0 0.0
    %1178 = vmatprep.subr.mxu0 0.0
    %1179 = vmatpush2.msra.mxu0 0.0
    %1180 = vmatprep.subr.mxu0 0.0
    %1181 = vmatpush2.msra.mxu0 0.0
    %1182 = vmatprep.subr.mxu0 0.0
    %1183 = vmatpush2.msra.mxu0 0.0
    %1184 = vmatprep.subr.mxu0 0.0
    %1185 = vmatpush2.msra.mxu0 0.0
    %1186 = vmatprep.subr.mxu0 0.0
    %1187 = vmatpush2.msra.mxu0 0.0
    %1188 = vmatprep.mubr.f32.mxu0 0.0
    %1189 = vmatmul.mubr.f32.gmra.mxu0 %v89
    %v1190 = vpop.f32.mrf.mxu0
    %v1191 = vadd.f32 %v1120, %v1190
    %v1192 = vpop.f32.mrf.mxu0
    %v1193 = vadd.f32 %v1122, %v1192
    %1194 = vdwg.mxu0
    %1195 = vmatprep.subr.mxu0 %v198
    %1196 = vmatpush1.msra.mxu0 %v197
    %1197 = vmatprep.subr.mxu0 %v191
    %1198 = vmatpush1.msra.mxu0 %v190
    %1199 = vmatprep.subr.mxu0 %v184
    %1200 = vmatpush1.msra.mxu0 %v183
    %1201 = vmatprep.subr.mxu0 %v177
    %1202 = vmatpush1.msra.mxu0 %v176
    %1203 = vmatprep.subr.mxu0 %v170
    %1204 = vmatpush1.msra.mxu0 %v169
    %1205 = vmatprep.subr.mxu0 %v163
    %1206 = vmatpush1.msra.mxu0 %v162
    %1207 = vmatprep.subr.mxu0 %v156
    %1208 = vmatpush1.msra.mxu0 %v155
    %1209 = vmatprep.subr.mxu0 %v149
    %1210 = vmatpush1.msra.mxu0 %v148
    %1211 = vmatprep.subr.mxu0 %v142
    %1212 = vmatpush1.msra.mxu0 %v141
    %1213 = vmatprep.subr.mxu0 %v135
    %1214 = vmatpush1.msra.mxu0 %v134
    %1215 = vmatprep.subr.mxu0 %v128
    %1216 = vmatpush1.msra.mxu0 %v127
    %1217 = vmatprep.subr.mxu0 %v121
    %1218 = vmatpush1.msra.mxu0 %v120
    %1219 = vmatprep.subr.mxu0 %v114
    %1220 = vmatpush1.msra.mxu0 %v113
    %1221 = vmatprep.subr.mxu0 %v107
    %1222 = vmatpush1.msra.mxu0 %v106
    %1223 = vmatprep.subr.mxu0 %v100
    %1224 = vmatpush1.msra.mxu0 %v99
    %1225 = vmatprep.subr.mxu0 %v93
    %1226 = vmatpush1.msra.mxu0 %v92
    %1227 = vmatprep.subr.mxu0 %v310
    %1228 = vmatpush2.msra.mxu0 %v309
    %1229 = vmatprep.subr.mxu0 %v303
    %1230 = vmatpush2.msra.mxu0 %v302
    %1231 = vmatprep.subr.mxu0 %v296
    %1232 = vmatpush2.msra.mxu0 %v295
    %1233 = vmatprep.subr.mxu0 %v289
    %1234 = vmatpush2.msra.mxu0 %v288
    %1235 = vmatprep.subr.mxu0 %v282
    %1236 = vmatpush2.msra.mxu0 %v281
    %1237 = vmatprep.subr.mxu0 %v275
    %1238 = vmatpush2.msra.mxu0 %v274
    %1239 = vmatprep.subr.mxu0 %v268
    %1240 = vmatpush2.msra.mxu0 %v267
    %1241 = vmatprep.subr.mxu0 %v261
    %1242 = vmatpush2.msra.mxu0 %v260
    %1243 = vmatprep.subr.mxu0 %v254
    %1244 = vmatpush2.msra.mxu0 %v253
    %1245 = vmatprep.subr.mxu0 %v247
    %1246 = vmatpush2.msra.mxu0 %v246
    %1247 = vmatprep.subr.mxu0 %v240
    %1248 = vmatpush2.msra.mxu0 %v239
    %1249 = vmatprep.subr.mxu0 %v233
    %1250 = vmatpush2.msra.mxu0 %v232
    %1251 = vmatprep.subr.mxu0 %v226
    %1252 = vmatpush2.msra.mxu0 %v225
    %1253 = vmatprep.subr.mxu0 %v219
    %1254 = vmatpush2.msra.mxu0 %v218
    %1255 = vmatprep.subr.mxu0 %v212
    %1256 = vmatpush2.msra.mxu0 %v211
    %1257 = vmatprep.subr.mxu0 %v205
    %1258 = vmatpush2.msra.mxu0 %v204
    %1259 = vmatprep.mubr.f32.mxu0 %v84
    %1260 = vmatmul.mubr.f32.gmra.mxu0 %v83
    %v1261 = vpop.f32.mrf.mxu0
    %v1262 = vadd.f32 %v887, %v1261
    %v1263 = vpop.f32.mrf.mxu0
    %v1264 = vadd.f32 %v891, %v1263
    %1265 = vdwg.mxu0
    %1266 = vmatprep.subr.mxu0 %v422
    %1267 = vmatpush1.msra.mxu0 %v421
    %1268 = vmatprep.subr.mxu0 %v415
    %1269 = vmatpush1.msra.mxu0 %v414
    %1270 = vmatprep.subr.mxu0 %v408
    %1271 = vmatpush1.msra.mxu0 %v407
    %1272 = vmatprep.subr.mxu0 %v401
    %1273 = vmatpush1.msra.mxu0 %v400
    %1274 = vmatprep.subr.mxu0 %v394
    %1275 = vmatpush1.msra.mxu0 %v393
    %1276 = vmatprep.subr.mxu0 %v387
    %1277 = vmatpush1.msra.mxu0 %v386
    %1278 = vmatprep.subr.mxu0 %v380
    %1279 = vmatpush1.msra.mxu0 %v379
    %1280 = vmatprep.subr.mxu0 %v373
    %1281 = vmatpush1.msra.mxu0 %v372
    %1282 = vmatprep.subr.mxu0 %v366
    %1283 = vmatpush1.msra.mxu0 %v365
    %1284 = vmatprep.subr.mxu0 %v359
    %1285 = vmatpush1.msra.mxu0 %v358
    %1286 = vmatprep.subr.mxu0 %v352
    %1287 = vmatpush1.msra.mxu0 %v351
    %1288 = vmatprep.subr.mxu0 %v345
    %1289 = vmatpush1.msra.mxu0 %v344
    %1290 = vmatprep.subr.mxu0 %v338
    %1291 = vmatpush1.msra.mxu0 %v337
    %1292 = vmatprep.subr.mxu0 %v331
    %1293 = vmatpush1.msra.mxu0 %v330
    %1294 = vmatprep.subr.mxu0 %v324
    %1295 = vmatpush1.msra.mxu0 %v323
    %1296 = vmatprep.subr.mxu0 %v317
    %1297 = vmatpush1.msra.mxu0 %v316
    %1298 = vmatprep.subr.mxu0 %v534
    %1299 = vmatpush2.msra.mxu0 %v533
    %1300 = vmatprep.subr.mxu0 %v527
    %1301 = vmatpush2.msra.mxu0 %v526
    %1302 = vmatprep.subr.mxu0 %v520
    %1303 = vmatpush2.msra.mxu0 %v519
    %1304 = vmatprep.subr.mxu0 %v513
    %1305 = vmatpush2.msra.mxu0 %v512
    %1306 = vmatprep.subr.mxu0 %v506
    %1307 = vmatpush2.msra.mxu0 %v505
    %1308 = vmatprep.subr.mxu0 %v499
    %1309 = vmatpush2.msra.mxu0 %v498
    %1310 = vmatprep.subr.mxu0 %v492
    %1311 = vmatpush2.msra.mxu0 %v491
    %1312 = vmatprep.subr.mxu0 %v485
    %1313 = vmatpush2.msra.mxu0 %v484
    %1314 = vmatprep.subr.mxu0 %v478
    %1315 = vmatpush2.msra.mxu0 %v477
    %1316 = vmatprep.subr.mxu0 %v471
    %1317 = vmatpush2.msra.mxu0 %v470
    %1318 = vmatprep.subr.mxu0 %v464
    %1319 = vmatpush2.msra.mxu0 %v463
    %1320 = vmatprep.subr.mxu0 %v457
    %1321 = vmatpush2.msra.mxu0 %v456
    %1322 = vmatprep.subr.mxu0 %v450
    %1323 = vmatpush2.msra.mxu0 %v449
    %1324 = vmatprep.subr.mxu0 %v443
    %1325 = vmatpush2.msra.mxu0 %v442
    %1326 = vmatprep.subr.mxu0 %v436
    %1327 = vmatpush2.msra.mxu0 %v435
    %1328 = vmatprep.subr.mxu0 %v429
    %1329 = vmatpush2.msra.mxu0 %v428
    %1330 = vmatprep.mubr.f32.mxu0 %v86
    %1331 = vmatmul.mubr.f32.gmra.mxu0 %v85
    %v1332 = vpop.f32.mrf.mxu0
    %v1333 = vadd.f32 %v1262, %v1332
    %v1334 = vpop.f32.mrf.mxu0
    %v1335 = vadd.f32 %v1264, %v1334
    %1336 = vdwg.mxu0
    %1337 = vmatprep.subr.mxu0 %v646
    %1338 = vmatpush1.msra.mxu0 %v645
    %1339 = vmatprep.subr.mxu0 %v639
    %1340 = vmatpush1.msra.mxu0 %v638
    %1341 = vmatprep.subr.mxu0 %v632
    %1342 = vmatpush1.msra.mxu0 %v631
    %1343 = vmatprep.subr.mxu0 %v625
    %1344 = vmatpush1.msra.mxu0 %v624
    %1345 = vmatprep.subr.mxu0 %v618
    %1346 = vmatpush1.msra.mxu0 %v617
    %1347 = vmatprep.subr.mxu0 %v611
    %1348 = vmatpush1.msra.mxu0 %v610
    %1349 = vmatprep.subr.mxu0 %v604
    %1350 = vmatpush1.msra.mxu0 %v603
    %1351 = vmatprep.subr.mxu0 %v597
    %1352 = vmatpush1.msra.mxu0 %v596
    %1353 = vmatprep.subr.mxu0 %v590
    %1354 = vmatpush1.msra.mxu0 %v589
    %1355 = vmatprep.subr.mxu0 %v583
    %1356 = vmatpush1.msra.mxu0 %v582
    %1357 = vmatprep.subr.mxu0 %v576
    %1358 = vmatpush1.msra.mxu0 %v575
    %1359 = vmatprep.subr.mxu0 %v569
    %1360 = vmatpush1.msra.mxu0 %v568
    %1361 = vmatprep.subr.mxu0 %v562
    %1362 = vmatpush1.msra.mxu0 %v561
    %1363 = vmatprep.subr.mxu0 %v555
    %1364 = vmatpush1.msra.mxu0 %v554
    %1365 = vmatprep.subr.mxu0 %v548
    %1366 = vmatpush1.msra.mxu0 %v547
    %1367 = vmatprep.subr.mxu0 %v541
    %1368 = vmatpush1.msra.mxu0 %v540
    %1369 = vmatprep.subr.mxu0 %v758
    %1370 = vmatpush2.msra.mxu0 %v757
    %1371 = vmatprep.subr.mxu0 %v751
    %1372 = vmatpush2.msra.mxu0 %v750
    %1373 = vmatprep.subr.mxu0 %v744
    %1374 = vmatpush2.msra.mxu0 %v743
    %1375 = vmatprep.subr.mxu0 %v737
    %1376 = vmatpush2.msra.mxu0 %v736
    %1377 = vmatprep.subr.mxu0 %v730
    %1378 = vmatpush2.msra.mxu0 %v729
    %1379 = vmatprep.subr.mxu0 %v723
    %1380 = vmatpush2.msra.mxu0 %v722
    %1381 = vmatprep.subr.mxu0 %v716
    %1382 = vmatpush2.msra.mxu0 %v715
    %1383 = vmatprep.subr.mxu0 %v709
    %1384 = vmatpush2.msra.mxu0 %v708
    %1385 = vmatprep.subr.mxu0 %v702
    %1386 = vmatpush2.msra.mxu0 %v701
    %1387 = vmatprep.subr.mxu0 %v695
    %1388 = vmatpush2.msra.mxu0 %v694
    %1389 = vmatprep.subr.mxu0 %v688
    %1390 = vmatpush2.msra.mxu0 %v687
    %1391 = vmatprep.subr.mxu0 %v681
    %1392 = vmatpush2.msra.mxu0 %v680
    %1393 = vmatprep.subr.mxu0 %v674
    %1394 = vmatpush2.msra.mxu0 %v673
    %1395 = vmatprep.subr.mxu0 %v667
    %1396 = vmatpush2.msra.mxu0 %v666
    %1397 = vmatprep.subr.mxu0 %v660
    %1398 = vmatpush2.msra.mxu0 %v659
    %1399 = vmatprep.subr.mxu0 %v653
    %1400 = vmatpush2.msra.mxu0 %v652
    %1401 = vmatprep.mubr.f32.mxu0 %v88
    %1402 = vmatmul.mubr.f32.gmra.mxu0 %v87
    %v1403 = vpop.f32.mrf.mxu0
    %v1404 = vadd.f32 %v1333, %v1403
    %v1405 = vpop.f32.mrf.mxu0
    %v1406 = vadd.f32 %v1335, %v1405
    %1407 = vdwg.mxu0
    %1408 = vmatprep.subr.mxu0 %v870
    %1409 = vmatpush1.msra.mxu0 %v869
    %1410 = vmatprep.subr.mxu0 %v863
    %1411 = vmatpush1.msra.mxu0 %v862
    %1412 = vmatprep.subr.mxu0 %v856
    %1413 = vmatpush1.msra.mxu0 %v855
    %1414 = vmatprep.subr.mxu0 %v849
    %1415 = vmatpush1.msra.mxu0 %v848
    %1416 = vmatprep.subr.mxu0 %v842
    %1417 = vmatpush1.msra.mxu0 %v841
    %1418 = vmatprep.subr.mxu0 %v835
    %1419 = vmatpush1.msra.mxu0 %v834
    %1420 = vmatprep.subr.mxu0 %v828
    %1421 = vmatpush1.msra.mxu0 %v827
    %1422 = vmatprep.subr.mxu0 %v821
    %1423 = vmatpush1.msra.mxu0 %v820
    %1424 = vmatprep.subr.mxu0 %v814
    %1425 = vmatpush1.msra.mxu0 %v813
    %1426 = vmatprep.subr.mxu0 %v807
    %1427 = vmatpush1.msra.mxu0 %v806
    %1428 = vmatprep.subr.mxu0 %v800
    %1429 = vmatpush1.msra.mxu0 %v799
    %1430 = vmatprep.subr.mxu0 %v793
    %1431 = vmatpush1.msra.mxu0 %v792
    %1432 = vmatprep.subr.mxu0 %v786
    %1433 = vmatpush1.msra.mxu0 %v785
    %1434 = vmatprep.subr.mxu0 %v779
    %1435 = vmatpush1.msra.mxu0 %v778
    %1436 = vmatprep.subr.mxu0 %v772
    %1437 = vmatpush1.msra.mxu0 %v771
    %1438 = vmatprep.subr.mxu0 %v765
    %1439 = vmatpush1.msra.mxu0 %v764
    %1440 = vmatprep.subr.mxu0 0.0
    %1441 = vmatpush2.msra.mxu0 0.0
    %1442 = vmatprep.subr.mxu0 0.0
    %1443 = vmatpush2.msra.mxu0 0.0
    %1444 = vmatprep.subr.mxu0 0.0
    %1445 = vmatpush2.msra.mxu0 0.0
    %1446 = vmatprep.subr.mxu0 0.0
    %1447 = vmatpush2.msra.mxu0 0.0
    %1448 = vmatprep.subr.mxu0 0.0
    %1449 = vmatpush2.msra.mxu0 0.0
    %1450 = vmatprep.subr.mxu0 0.0
    %1451 = vmatpush2.msra.mxu0 0.0
    %1452 = vmatprep.subr.mxu0 0.0
    %1453 = vmatpush2.msra.mxu0 0.0
    %1454 = vmatprep.subr.mxu0 0.0
    %1455 = vmatpush2.msra.mxu0 0.0
    %1456 = vmatprep.subr.mxu0 0.0
    %1457 = vmatpush2.msra.mxu0 0.0
    %1458 = vmatprep.subr.mxu0 0.0
    %1459 = vmatpush2.msra.mxu0 0.0
    %1460 = vmatprep.subr.mxu0 0.0
    %1461 = vmatpush2.msra.mxu0 0.0
    %1462 = vmatprep.subr.mxu0 0.0
    %1463 = vmatpush2.msra.mxu0 0.0
    %1464 = vmatprep.subr.mxu0 0.0
    %1465 = vmatpush2.msra.mxu0 0.0
    %1466 = vmatprep.subr.mxu0 0.0
    %1467 = vmatpush2.msra.mxu0 0.0
    %1468 = vmatprep.subr.mxu0 0.0
    %1469 = vmatpush2.msra.mxu0 0.0
    %1470 = vmatprep.subr.mxu0 0.0
    %1471 = vmatpush2.msra.mxu0 0.0
    %1472 = vmatprep.mubr.f32.mxu0 0.0
    %1473 = vmatmul.mubr.f32.gmra.mxu0 %v89
    %v1474 = vpop.f32.mrf.mxu0
    %v1475 = vadd.f32 %v1404, %v1474
    %v1476 = vpop.f32.mrf.mxu0
    %v1477 = vadd.f32 %v1406, %v1476
    %1478 = vdwg.mxu0
    %1479 = vmatprep.subr.mxu0 %v200
    %1480 = vmatpush1.msra.mxu0 %v199
    %1481 = vmatprep.subr.mxu0 %v193
    %1482 = vmatpush1.msra.mxu0 %v192
    %1483 = vmatprep.subr.mxu0 %v186
    %1484 = vmatpush1.msra.mxu0 %v185
    %1485 = vmatprep.subr.mxu0 %v179
    %1486 = vmatpush1.msra.mxu0 %v178
    %1487 = vmatprep.subr.mxu0 %v172
    %1488 = vmatpush1.msra.mxu0 %v171
    %1489 = vmatprep.subr.mxu0 %v165
    %1490 = vmatpush1.msra.mxu0 %v164
    %1491 = vmatprep.subr.mxu0 %v158
    %1492 = vmatpush1.msra.mxu0 %v157
    %1493 = vmatprep.subr.mxu0 %v151
    %1494 = vmatpush1.msra.mxu0 %v150
    %1495 = vmatprep.subr.mxu0 %v144
    %1496 = vmatpush1.msra.mxu0 %v143
    %1497 = vmatprep.subr.mxu0 %v137
    %1498 = vmatpush1.msra.mxu0 %v136
    %1499 = vmatprep.subr.mxu0 %v130
    %1500 = vmatpush1.msra.mxu0 %v129
    %1501 = vmatprep.subr.mxu0 %v123
    %1502 = vmatpush1.msra.mxu0 %v122
    %1503 = vmatprep.subr.mxu0 %v116
    %1504 = vmatpush1.msra.mxu0 %v115
    %1505 = vmatprep.subr.mxu0 %v109
    %1506 = vmatpush1.msra.mxu0 %v108
    %1507 = vmatprep.subr.mxu0 %v102
    %1508 = vmatpush1.msra.mxu0 %v101
    %1509 = vmatprep.subr.mxu0 %v95
    %1510 = vmatpush1.msra.mxu0 %v94
    %1511 = vmatprep.subr.mxu0 %v312
    %1512 = vmatpush2.msra.mxu0 %v311
    %1513 = vmatprep.subr.mxu0 %v305
    %1514 = vmatpush2.msra.mxu0 %v304
    %1515 = vmatprep.subr.mxu0 %v298
    %1516 = vmatpush2.msra.mxu0 %v297
    %1517 = vmatprep.subr.mxu0 %v291
    %1518 = vmatpush2.msra.mxu0 %v290
    %1519 = vmatprep.subr.mxu0 %v284
    %1520 = vmatpush2.msra.mxu0 %v283
    %1521 = vmatprep.subr.mxu0 %v277
    %1522 = vmatpush2.msra.mxu0 %v276
    %1523 = vmatprep.subr.mxu0 %v270
    %1524 = vmatpush2.msra.mxu0 %v269
    %1525 = vmatprep.subr.mxu0 %v263
    %1526 = vmatpush2.msra.mxu0 %v262
    %1527 = vmatprep.subr.mxu0 %v256
    %1528 = vmatpush2.msra.mxu0 %v255
    %1529 = vmatprep.subr.mxu0 %v249
    %1530 = vmatpush2.msra.mxu0 %v248
    %1531 = vmatprep.subr.mxu0 %v242
    %1532 = vmatpush2.msra.mxu0 %v241
    %1533 = vmatprep.subr.mxu0 %v235
    %1534 = vmatpush2.msra.mxu0 %v234
    %1535 = vmatprep.subr.mxu0 %v228
    %1536 = vmatpush2.msra.mxu0 %v227
    %1537 = vmatprep.subr.mxu0 %v221
    %1538 = vmatpush2.msra.mxu0 %v220
    %1539 = vmatprep.subr.mxu0 %v214
    %1540 = vmatpush2.msra.mxu0 %v213
    %1541 = vmatprep.subr.mxu0 %v207
    %1542 = vmatpush2.msra.mxu0 %v206
    %1543 = vmatprep.mubr.f32.mxu0 %v84
    %1544 = vmatmul.mubr.f32.gmra.mxu0 %v83
    %v1545 = vpop.f32.mrf.mxu0
    %v1546 = vadd.f32 %v895, %v1545
    %v1547 = vpop.f32.mrf.mxu0
    %v1548 = vadd.f32 %v899, %v1547
    %1549 = vdwg.mxu0
    %1550 = vmatprep.subr.mxu0 %v424
    %1551 = vmatpush1.msra.mxu0 %v423
    %1552 = vmatprep.subr.mxu0 %v417
    %1553 = vmatpush1.msra.mxu0 %v416
    %1554 = vmatprep.subr.mxu0 %v410
    %1555 = vmatpush1.msra.mxu0 %v409
    %1556 = vmatprep.subr.mxu0 %v403
    %1557 = vmatpush1.msra.mxu0 %v402
    %1558 = vmatprep.subr.mxu0 %v396
    %1559 = vmatpush1.msra.mxu0 %v395
    %1560 = vmatprep.subr.mxu0 %v389
    %1561 = vmatpush1.msra.mxu0 %v388
    %1562 = vmatprep.subr.mxu0 %v382
    %1563 = vmatpush1.msra.mxu0 %v381
    %1564 = vmatprep.subr.mxu0 %v375
    %1565 = vmatpush1.msra.mxu0 %v374
    %1566 = vmatprep.subr.mxu0 %v368
    %1567 = vmatpush1.msra.mxu0 %v367
    %1568 = vmatprep.subr.mxu0 %v361
    %1569 = vmatpush1.msra.mxu0 %v360
    %1570 = vmatprep.subr.mxu0 %v354
    %1571 = vmatpush1.msra.mxu0 %v353
    %1572 = vmatprep.subr.mxu0 %v347
    %1573 = vmatpush1.msra.mxu0 %v346
    %1574 = vmatprep.subr.mxu0 %v340
    %1575 = vmatpush1.msra.mxu0 %v339
    %1576 = vmatprep.subr.mxu0 %v333
    %1577 = vmatpush1.msra.mxu0 %v332
    %1578 = vmatprep.subr.mxu0 %v326
    %1579 = vmatpush1.msra.mxu0 %v325
    %1580 = vmatprep.subr.mxu0 %v319
    %1581 = vmatpush1.msra.mxu0 %v318
    %1582 = vmatprep.subr.mxu0 %v536
    %1583 = vmatpush2.msra.mxu0 %v535
    %1584 = vmatprep.subr.mxu0 %v529
    %1585 = vmatpush2.msra.mxu0 %v528
    %1586 = vmatprep.subr.mxu0 %v522
    %1587 = vmatpush2.msra.mxu0 %v521
    %1588 = vmatprep.subr.mxu0 %v515
    %1589 = vmatpush2.msra.mxu0 %v514
    %1590 = vmatprep.subr.mxu0 %v508
    %1591 = vmatpush2.msra.mxu0 %v507
    %1592 = vmatprep.subr.mxu0 %v501
    %1593 = vmatpush2.msra.mxu0 %v500
    %1594 = vmatprep.subr.mxu0 %v494
    %1595 = vmatpush2.msra.mxu0 %v493
    %1596 = vmatprep.subr.mxu0 %v487
    %1597 = vmatpush2.msra.mxu0 %v486
    %1598 = vmatprep.subr.mxu0 %v480
    %1599 = vmatpush2.msra.mxu0 %v479
    %1600 = vmatprep.subr.mxu0 %v473
    %1601 = vmatpush2.msra.mxu0 %v472
    %1602 = vmatprep.subr.mxu0 %v466
    %1603 = vmatpush2.msra.mxu0 %v465
    %1604 = vmatprep.subr.mxu0 %v459
    %1605 = vmatpush2.msra.mxu0 %v458
    %1606 = vmatprep.subr.mxu0 %v452
    %1607 = vmatpush2.msra.mxu0 %v451
    %1608 = vmatprep.subr.mxu0 %v445
    %1609 = vmatpush2.msra.mxu0 %v444
    %1610 = vmatprep.subr.mxu0 %v438
    %1611 = vmatpush2.msra.mxu0 %v437
    %1612 = vmatprep.subr.mxu0 %v431
    %1613 = vmatpush2.msra.mxu0 %v430
    %1614 = vmatprep.mubr.f32.mxu0 %v86
    %1615 = vmatmul.mubr.f32.gmra.mxu0 %v85
    %v1616 = vpop.f32.mrf.mxu0
    %v1617 = vadd.f32 %v1546, %v1616
    %v1618 = vpop.f32.mrf.mxu0
    %v1619 = vadd.f32 %v1548, %v1618
    %1620 = vdwg.mxu0
    %1621 = vmatprep.subr.mxu0 %v648
    %1622 = vmatpush1.msra.mxu0 %v647
    %1623 = vmatprep.subr.mxu0 %v641
    %1624 = vmatpush1.msra.mxu0 %v640
    %1625 = vmatprep.subr.mxu0 %v634
    %1626 = vmatpush1.msra.mxu0 %v633
    %1627 = vmatprep.subr.mxu0 %v627
    %1628 = vmatpush1.msra.mxu0 %v626
    %1629 = vmatprep.subr.mxu0 %v620
    %1630 = vmatpush1.msra.mxu0 %v619
    %1631 = vmatprep.subr.mxu0 %v613
    %1632 = vmatpush1.msra.mxu0 %v612
    %1633 = vmatprep.subr.mxu0 %v606
    %1634 = vmatpush1.msra.mxu0 %v605
    %1635 = vmatprep.subr.mxu0 %v599
    %1636 = vmatpush1.msra.mxu0 %v598
    %1637 = vmatprep.subr.mxu0 %v592
    %1638 = vmatpush1.msra.mxu0 %v591
    %1639 = vmatprep.subr.mxu0 %v585
    %1640 = vmatpush1.msra.mxu0 %v584
    %1641 = vmatprep.subr.mxu0 %v578
    %1642 = vmatpush1.msra.mxu0 %v577
    %1643 = vmatprep.subr.mxu0 %v571
    %1644 = vmatpush1.msra.mxu0 %v570
    %1645 = vmatprep.subr.mxu0 %v564
    %1646 = vmatpush1.msra.mxu0 %v563
    %1647 = vmatprep.subr.mxu0 %v557
    %1648 = vmatpush1.msra.mxu0 %v556
    %1649 = vmatprep.subr.mxu0 %v550
    %1650 = vmatpush1.msra.mxu0 %v549
    %1651 = vmatprep.subr.mxu0 %v543
    %1652 = vmatpush1.msra.mxu0 %v542
    %1653 = vmatprep.subr.mxu0 %v760
    %1654 = vmatpush2.msra.mxu0 %v759
    %1655 = vmatprep.subr.mxu0 %v753
    %1656 = vmatpush2.msra.mxu0 %v752
    %1657 = vmatprep.subr.mxu0 %v746
    %1658 = vmatpush2.msra.mxu0 %v745
    %1659 = vmatprep.subr.mxu0 %v739
    %1660 = vmatpush2.msra.mxu0 %v738
    %1661 = vmatprep.subr.mxu0 %v732
    %1662 = vmatpush2.msra.mxu0 %v731
    %1663 = vmatprep.subr.mxu0 %v725
    %1664 = vmatpush2.msra.mxu0 %v724
    %1665 = vmatprep.subr.mxu0 %v718
    %1666 = vmatpush2.msra.mxu0 %v717
    %1667 = vmatprep.subr.mxu0 %v711
    %1668 = vmatpush2.msra.mxu0 %v710
    %1669 = vmatprep.subr.mxu0 %v704
    %1670 = vmatpush2.msra.mxu0 %v703
    %1671 = vmatprep.subr.mxu0 %v697
    %1672 = vmatpush2.msra.mxu0 %v696
    %1673 = vmatprep.subr.mxu0 %v690
    %1674 = vmatpush2.msra.mxu0 %v689
    %1675 = vmatprep.subr.mxu0 %v683
    %1676 = vmatpush2.msra.mxu0 %v682
    %1677 = vmatprep.subr.mxu0 %v676
    %1678 = vmatpush2.msra.mxu0 %v675
    %1679 = vmatprep.subr.mxu0 %v669
    %1680 = vmatpush2.msra.mxu0 %v668
    %1681 = vmatprep.subr.mxu0 %v662
    %1682 = vmatpush2.msra.mxu0 %v661
    %1683 = vmatprep.subr.mxu0 %v655
    %1684 = vmatpush2.msra.mxu0 %v654
    %1685 = vmatprep.mubr.f32.mxu0 %v88
    %1686 = vmatmul.mubr.f32.gmra.mxu0 %v87
    %v1687 = vpop.f32.mrf.mxu0
    %v1688 = vadd.f32 %v1617, %v1687
    %v1689 = vpop.f32.mrf.mxu0
    %v1690 = vadd.f32 %v1619, %v1689
    %1691 = vdwg.mxu0
    %1692 = vmatprep.subr.mxu0 %v872
    %1693 = vmatpush1.msra.mxu0 %v871
    %1694 = vmatprep.subr.mxu0 %v865
    %1695 = vmatpush1.msra.mxu0 %v864
    %1696 = vmatprep.subr.mxu0 %v858
    %1697 = vmatpush1.msra.mxu0 %v857
    %1698 = vmatprep.subr.mxu0 %v851
    %1699 = vmatpush1.msra.mxu0 %v850
    %1700 = vmatprep.subr.mxu0 %v844
    %1701 = vmatpush1.msra.mxu0 %v843
    %1702 = vmatprep.subr.mxu0 %v837
    %1703 = vmatpush1.msra.mxu0 %v836
    %1704 = vmatprep.subr.mxu0 %v830
    %1705 = vmatpush1.msra.mxu0 %v829
    %1706 = vmatprep.subr.mxu0 %v823
    %1707 = vmatpush1.msra.mxu0 %v822
    %1708 = vmatprep.subr.mxu0 %v816
    %1709 = vmatpush1.msra.mxu0 %v815
    %1710 = vmatprep.subr.mxu0 %v809
    %1711 = vmatpush1.msra.mxu0 %v808
    %1712 = vmatprep.subr.mxu0 %v802
    %1713 = vmatpush1.msra.mxu0 %v801
    %1714 = vmatprep.subr.mxu0 %v795
    %1715 = vmatpush1.msra.mxu0 %v794
    %1716 = vmatprep.subr.mxu0 %v788
    %1717 = vmatpush1.msra.mxu0 %v787
    %1718 = vmatprep.subr.mxu0 %v781
    %1719 = vmatpush1.msra.mxu0 %v780
    %1720 = vmatprep.subr.mxu0 %v774
    %1721 = vmatpush1.msra.mxu0 %v773
    %1722 = vmatprep.subr.mxu0 %v767
    %1723 = vmatpush1.msra.mxu0 %v766
    %1724 = vmatprep.subr.mxu0 0.0
    %1725 = vmatpush2.msra.mxu0 0.0
    %1726 = vmatprep.subr.mxu0 0.0
    %1727 = vmatpush2.msra.mxu0 0.0
    %1728 = vmatprep.subr.mxu0 0.0
    %1729 = vmatpush2.msra.mxu0 0.0
    %1730 = vmatprep.subr.mxu0 0.0
    %1731 = vmatpush2.msra.mxu0 0.0
    %1732 = vmatprep.subr.mxu0 0.0
    %1733 = vmatpush2.msra.mxu0 0.0
    %1734 = vmatprep.subr.mxu0 0.0
    %1735 = vmatpush2.msra.mxu0 0.0
    %1736 = vmatprep.subr.mxu0 0.0
    %1737 = vmatpush2.msra.mxu0 0.0
    %1738 = vmatprep.subr.mxu0 0.0
    %1739 = vmatpush2.msra.mxu0 0.0
    %1740 = vmatprep.subr.mxu0 0.0
    %1741 = vmatpush2.msra.mxu0 0.0
    %1742 = vmatprep.subr.mxu0 0.0
    %1743 = vmatpush2.msra.mxu0 0.0
    %1744 = vmatprep.subr.mxu0 0.0
    %1745 = vmatpush2.msra.mxu0 0.0
    %1746 = vmatprep.subr.mxu0 0.0
    %1747 = vmatpush2.msra.mxu0 0.0
    %1748 = vmatprep.subr.mxu0 0.0
    %1749 = vmatpush2.msra.mxu0 0.0
    %1750 = vmatprep.subr.mxu0 0.0
    %1751 = vmatpush2.msra.mxu0 0.0
    %1752 = vmatprep.subr.mxu0 0.0
    %1753 = vmatpush2.msra.mxu0 0.0
    %1754 = vmatprep.subr.mxu0 0.0
    %1755 = vmatpush2.msra.mxu0 0.0
    %1756 = vmatprep.mubr.f32.mxu0 0.0
    %1757 = vmatmul.mubr.f32.gmra.mxu0 %v89
    %v1758 = vpop.f32.mrf.mxu0
    %v1759 = vadd.f32 %v1688, %v1758
    %v1760 = vpop.f32.mrf.mxu0
    %v1761 = vadd.f32 %v1690, %v1760
    %1762 = vdwg.mxu0
    %1763 = vmatprep.subr.mxu0 0.0
    %1764 = vmatpush1.msra.mxu0 %v201
    %1765 = vmatprep.subr.mxu0 0.0
    %1766 = vmatpush1.msra.mxu0 %v194
    %1767 = vmatprep.subr.mxu0 0.0
    %1768 = vmatpush1.msra.mxu0 %v187
    %1769 = vmatprep.subr.mxu0 0.0
    %1770 = vmatpush1.msra.mxu0 %v180
    %1771 = vmatprep.subr.mxu0 0.0
    %1772 = vmatpush1.msra.mxu0 %v173
    %1773 = vmatprep.subr.mxu0 0.0
    %1774 = vmatpush1.msra.mxu0 %v166
    %1775 = vmatprep.subr.mxu0 0.0
    %1776 = vmatpush1.msra.mxu0 %v159
    %1777 = vmatprep.subr.mxu0 0.0
    %1778 = vmatpush1.msra.mxu0 %v152
    %1779 = vmatprep.subr.mxu0 0.0
    %1780 = vmatpush1.msra.mxu0 %v145
    %1781 = vmatprep.subr.mxu0 0.0
    %1782 = vmatpush1.msra.mxu0 %v138
    %1783 = vmatprep.subr.mxu0 0.0
    %1784 = vmatpush1.msra.mxu0 %v131
    %1785 = vmatprep.subr.mxu0 0.0
    %1786 = vmatpush1.msra.mxu0 %v124
    %1787 = vmatprep.subr.mxu0 0.0
    %1788 = vmatpush1.msra.mxu0 %v117
    %1789 = vmatprep.subr.mxu0 0.0
    %1790 = vmatpush1.msra.mxu0 %v110
    %1791 = vmatprep.subr.mxu0 0.0
    %1792 = vmatpush1.msra.mxu0 %v103
    %1793 = vmatprep.subr.mxu0 0.0
    %1794 = vmatpush1.msra.mxu0 %v96
    %1795 = vmatprep.subr.mxu0 0.0
    %1796 = vmatpush2.msra.mxu0 %v313
    %1797 = vmatprep.subr.mxu0 0.0
    %1798 = vmatpush2.msra.mxu0 %v306
    %1799 = vmatprep.subr.mxu0 0.0
    %1800 = vmatpush2.msra.mxu0 %v299
    %1801 = vmatprep.subr.mxu0 0.0
    %1802 = vmatpush2.msra.mxu0 %v292
    %1803 = vmatprep.subr.mxu0 0.0
    %1804 = vmatpush2.msra.mxu0 %v285
    %1805 = vmatprep.subr.mxu0 0.0
    %1806 = vmatpush2.msra.mxu0 %v278
    %1807 = vmatprep.subr.mxu0 0.0
    %1808 = vmatpush2.msra.mxu0 %v271
    %1809 = vmatprep.subr.mxu0 0.0
    %1810 = vmatpush2.msra.mxu0 %v264
    %1811 = vmatprep.subr.mxu0 0.0
    %1812 = vmatpush2.msra.mxu0 %v257
    %1813 = vmatprep.subr.mxu0 0.0
    %1814 = vmatpush2.msra.mxu0 %v250
    %1815 = vmatprep.subr.mxu0 0.0
    %1816 = vmatpush2.msra.mxu0 %v243
    %1817 = vmatprep.subr.mxu0 0.0
    %1818 = vmatpush2.msra.mxu0 %v236
    %1819 = vmatprep.subr.mxu0 0.0
    %1820 = vmatpush2.msra.mxu0 %v229
    %1821 = vmatprep.subr.mxu0 0.0
    %1822 = vmatpush2.msra.mxu0 %v222
    %1823 = vmatprep.subr.mxu0 0.0
    %1824 = vmatpush2.msra.mxu0 %v215
    %1825 = vmatprep.subr.mxu0 0.0
    %1826 = vmatpush2.msra.mxu0 %v208
    %1827 = vmatprep.mubr.f32.mxu0 %v84
    %1828 = vmatmul.mubr.f32.gmra.mxu0 %v83
    %v1829 = vpop.f32.mrf.mxu0
    %v1830 = vadd.f32 %v903, %v1829
    %v1831 = vpop.f32.mrf.mxu0
    %1832 = vdwg.mxu0
    %1833 = vmatprep.subr.mxu0 0.0
    %1834 = vmatpush1.msra.mxu0 %v425
    %1835 = vmatprep.subr.mxu0 0.0
    %1836 = vmatpush1.msra.mxu0 %v418
    %1837 = vmatprep.subr.mxu0 0.0
    %1838 = vmatpush1.msra.mxu0 %v411
    %1839 = vmatprep.subr.mxu0 0.0
    %1840 = vmatpush1.msra.mxu0 %v404
    %1841 = vmatprep.subr.mxu0 0.0
    %1842 = vmatpush1.msra.mxu0 %v397
    %1843 = vmatprep.subr.mxu0 0.0
    %1844 = vmatpush1.msra.mxu0 %v390
    %1845 = vmatprep.subr.mxu0 0.0
    %1846 = vmatpush1.msra.mxu0 %v383
    %1847 = vmatprep.subr.mxu0 0.0
    %1848 = vmatpush1.msra.mxu0 %v376
    %1849 = vmatprep.subr.mxu0 0.0
    %1850 = vmatpush1.msra.mxu0 %v369
    %1851 = vmatprep.subr.mxu0 0.0
    %1852 = vmatpush1.msra.mxu0 %v362
    %1853 = vmatprep.subr.mxu0 0.0
    %1854 = vmatpush1.msra.mxu0 %v355
    %1855 = vmatprep.subr.mxu0 0.0
    %1856 = vmatpush1.msra.mxu0 %v348
    %1857 = vmatprep.subr.mxu0 0.0
    %1858 = vmatpush1.msra.mxu0 %v341
    %1859 = vmatprep.subr.mxu0 0.0
    %1860 = vmatpush1.msra.mxu0 %v334
    %1861 = vmatprep.subr.mxu0 0.0
    %1862 = vmatpush1.msra.mxu0 %v327
    %1863 = vmatprep.subr.mxu0 0.0
    %1864 = vmatpush1.msra.mxu0 %v320
    %1865 = vmatprep.subr.mxu0 0.0
    %1866 = vmatpush2.msra.mxu0 %v537
    %1867 = vmatprep.subr.mxu0 0.0
    %1868 = vmatpush2.msra.mxu0 %v530
    %1869 = vmatprep.subr.mxu0 0.0
    %1870 = vmatpush2.msra.mxu0 %v523
    %1871 = vmatprep.subr.mxu0 0.0
    %1872 = vmatpush2.msra.mxu0 %v516
    %1873 = vmatprep.subr.mxu0 0.0
    %1874 = vmatpush2.msra.mxu0 %v509
    %1875 = vmatprep.subr.mxu0 0.0
    %1876 = vmatpush2.msra.mxu0 %v502
    %1877 = vmatprep.subr.mxu0 0.0
    %1878 = vmatpush2.msra.mxu0 %v495
    %1879 = vmatprep.subr.mxu0 0.0
    %1880 = vmatpush2.msra.mxu0 %v488
    %1881 = vmatprep.subr.mxu0 0.0
    %1882 = vmatpush2.msra.mxu0 %v481
    %1883 = vmatprep.subr.mxu0 0.0
    %1884 = vmatpush2.msra.mxu0 %v474
    %1885 = vmatprep.subr.mxu0 0.0
    %1886 = vmatpush2.msra.mxu0 %v467
    %1887 = vmatprep.subr.mxu0 0.0
    %1888 = vmatpush2.msra.mxu0 %v460
    %1889 = vmatprep.subr.mxu0 0.0
    %1890 = vmatpush2.msra.mxu0 %v453
    %1891 = vmatprep.subr.mxu0 0.0
    %1892 = vmatpush2.msra.mxu0 %v446
    %1893 = vmatprep.subr.mxu0 0.0
    %1894 = vmatpush2.msra.mxu0 %v439
    %1895 = vmatprep.subr.mxu0 0.0
    %1896 = vmatpush2.msra.mxu0 %v432
    %1897 = vmatprep.mubr.f32.mxu0 %v86
    %1898 = vmatmul.mubr.f32.gmra.mxu0 %v85
    %v1899 = vpop.f32.mrf.mxu0
    %v1900 = vadd.f32 %v1830, %v1899
    %v1901 = vpop.f32.mrf.mxu0
    %1902 = vdwg.mxu0
    %1903 = vmatprep.subr.mxu0 0.0
    %1904 = vmatpush1.msra.mxu0 %v649
    %1905 = vmatprep.subr.mxu0 0.0
    %1906 = vmatpush1.msra.mxu0 %v642
    %1907 = vmatprep.subr.mxu0 0.0
    %1908 = vmatpush1.msra.mxu0 %v635
    %1909 = vmatprep.subr.mxu0 0.0
    %1910 = vmatpush1.msra.mxu0 %v628
    %1911 = vmatprep.subr.mxu0 0.0
    %1912 = vmatpush1.msra.mxu0 %v621
    %1913 = vmatprep.subr.mxu0 0.0
    %1914 = vmatpush1.msra.mxu0 %v614
    %1915 = vmatprep.subr.mxu0 0.0
    %1916 = vmatpush1.msra.mxu0 %v607
    %1917 = vmatprep.subr.mxu0 0.0
    %1918 = vmatpush1.msra.mxu0 %v600
    %1919 = vmatprep.subr.mxu0 0.0
    %1920 = vmatpush1.msra.mxu0 %v593
    %1921 = vmatprep.subr.mxu0 0.0
    %1922 = vmatpush1.msra.mxu0 %v586
    %1923 = vmatprep.subr.mxu0 0.0
    %1924 = vmatpush1.msra.mxu0 %v579
    %1925 = vmatprep.subr.mxu0 0.0
    %1926 = vmatpush1.msra.mxu0 %v572
    %1927 = vmatprep.subr.mxu0 0.0
    %1928 = vmatpush1.msra.mxu0 %v565
    %1929 = vmatprep.subr.mxu0 0.0
    %1930 = vmatpush1.msra.mxu0 %v558
    %1931 = vmatprep.subr.mxu0 0.0
    %1932 = vmatpush1.msra.mxu0 %v551
    %1933 = vmatprep.subr.mxu0 0.0
    %1934 = vmatpush1.msra.mxu0 %v544
    %1935 = vmatprep.subr.mxu0 0.0
    %1936 = vmatpush2.msra.mxu0 %v761
    %1937 = vmatprep.subr.mxu0 0.0
    %1938 = vmatpush2.msra.mxu0 %v754
    %1939 = vmatprep.subr.mxu0 0.0
    %1940 = vmatpush2.msra.mxu0 %v747
    %1941 = vmatprep.subr.mxu0 0.0
    %1942 = vmatpush2.msra.mxu0 %v740
    %1943 = vmatprep.subr.mxu0 0.0
    %1944 = vmatpush2.msra.mxu0 %v733
    %1945 = vmatprep.subr.mxu0 0.0
    %1946 = vmatpush2.msra.mxu0 %v726
    %1947 = vmatprep.subr.mxu0 0.0
    %1948 = vmatpush2.msra.mxu0 %v719
    %1949 = vmatprep.subr.mxu0 0.0
    %1950 = vmatpush2.msra.mxu0 %v712
    %1951 = vmatprep.subr.mxu0 0.0
    %1952 = vmatpush2.msra.mxu0 %v705
    %1953 = vmatprep.subr.mxu0 0.0
    %1954 = vmatpush2.msra.mxu0 %v698
    %1955 = vmatprep.subr.mxu0 0.0
    %1956 = vmatpush2.msra.mxu0 %v691
    %1957 = vmatprep.subr.mxu0 0.0
    %1958 = vmatpush2.msra.mxu0 %v684
    %1959 = vmatprep.subr.mxu0 0.0
    %1960 = vmatpush2.msra.mxu0 %v677
    %1961 = vmatprep.subr.mxu0 0.0
    %1962 = vmatpush2.msra.mxu0 %v670
    %1963 = vmatprep.subr.mxu0 0.0
    %1964 = vmatpush2.msra.mxu0 %v663
    %1965 = vmatprep.subr.mxu0 0.0
    %1966 = vmatpush2.msra.mxu0 %v656
    %1967 = vmatprep.mubr.f32.mxu0 %v88
    %1968 = vmatmul.mubr.f32.gmra.mxu0 %v87
    %v1969 = vpop.f32.mrf.mxu0
    %v1970 = vadd.f32 %v1900, %v1969
    %v1971 = vpop.f32.mrf.mxu0
    %1972 = vdwg.mxu0
    %1973 = vmatprep.subr.mxu0 0.0
    %1974 = vmatpush1.msra.mxu0 %v873
    %1975 = vmatprep.subr.mxu0 0.0
    %1976 = vmatpush1.msra.mxu0 %v866
    %1977 = vmatprep.subr.mxu0 0.0
    %1978 = vmatpush1.msra.mxu0 %v859
    %1979 = vmatprep.subr.mxu0 0.0
    %1980 = vmatpush1.msra.mxu0 %v852
    %1981 = vmatprep.subr.mxu0 0.0
    %1982 = vmatpush1.msra.mxu0 %v845
    %1983 = vmatprep.subr.mxu0 0.0
    %1984 = vmatpush1.msra.mxu0 %v838
    %1985 = vmatprep.subr.mxu0 0.0
    %1986 = vmatpush1.msra.mxu0 %v831
    %1987 = vmatprep.subr.mxu0 0.0
    %1988 = vmatpush1.msra.mxu0 %v824
    %1989 = vmatprep.subr.mxu0 0.0
    %1990 = vmatpush1.msra.mxu0 %v817
    %1991 = vmatprep.subr.mxu0 0.0
    %1992 = vmatpush1.msra.mxu0 %v810
    %1993 = vmatprep.subr.mxu0 0.0
    %1994 = vmatpush1.msra.mxu0 %v803
    %1995 = vmatprep.subr.mxu0 0.0
    %1996 = vmatpush1.msra.mxu0 %v796
    %1997 = vmatprep.subr.mxu0 0.0
    %1998 = vmatpush1.msra.mxu0 %v789
    %1999 = vmatprep.subr.mxu0 0.0
    %2000 = vmatpush1.msra.mxu0 %v782
    %2001 = vmatprep.subr.mxu0 0.0
    %2002 = vmatpush1.msra.mxu0 %v775
    %2003 = vmatprep.subr.mxu0 0.0
    %2004 = vmatpush1.msra.mxu0 %v768
    %2005 = vmatprep.subr.mxu0 0.0
    %2006 = vmatpush2.msra.mxu0 0.0
    %2007 = vmatprep.subr.mxu0 0.0
    %2008 = vmatpush2.msra.mxu0 0.0
    %2009 = vmatprep.subr.mxu0 0.0
    %2010 = vmatpush2.msra.mxu0 0.0
    %2011 = vmatprep.subr.mxu0 0.0
    %2012 = vmatpush2.msra.mxu0 0.0
    %2013 = vmatprep.subr.mxu0 0.0
    %2014 = vmatpush2.msra.mxu0 0.0
    %2015 = vmatprep.subr.mxu0 0.0
    %2016 = vmatpush2.msra.mxu0 0.0
    %2017 = vmatprep.subr.mxu0 0.0
    %2018 = vmatpush2.msra.mxu0 0.0
    %2019 = vmatprep.subr.mxu0 0.0
    %2020 = vmatpush2.msra.mxu0 0.0
    %2021 = vmatprep.subr.mxu0 0.0
    %2022 = vmatpush2.msra.mxu0 0.0
    %2023 = vmatprep.subr.mxu0 0.0
    %2024 = vmatpush2.msra.mxu0 0.0
    %2025 = vmatprep.subr.mxu0 0.0
    %2026 = vmatpush2.msra.mxu0 0.0
    %2027 = vmatprep.subr.mxu0 0.0
    %2028 = vmatpush2.msra.mxu0 0.0
    %2029 = vmatprep.subr.mxu0 0.0
    %2030 = vmatpush2.msra.mxu0 0.0
    %2031 = vmatprep.subr.mxu0 0.0
    %2032 = vmatpush2.msra.mxu0 0.0
    %2033 = vmatprep.subr.mxu0 0.0
    %2034 = vmatpush2.msra.mxu0 0.0
    %2035 = vmatprep.subr.mxu0 0.0
    %2036 = vmatpush2.msra.mxu0 0.0
    %2037 = vmatprep.mubr.f32.mxu0 0.0
    %2038 = vmatmul.mubr.f32.gmra.mxu0 %v89
    %v2039 = vpop.f32.mrf.mxu0
    %v2040 = vadd.f32 %v1970, %v2039
    %v2041 = vpop.f32.mrf.mxu0
    %2042 = vdwg.mxu0
    %v2043 = vmax.f32 %v1191, 0.0
    %v2044 = vmax.f32 %v1193, 0.0
    %v2045 = vmax.f32 %v1475, 0.0
    %v2046 = vmax.f32 %v1477, 0.0
    %v2047 = vmax.f32 %v1759, 0.0
    %v2048 = vmax.f32 %v1761, 0.0
    %v2049 = vmax.f32 %v2040, 0.0
    %v2050 = vld [vmem:[#allocation8] sm:$0xff]
    %v2051 = vld [vmem:[#allocation8 + $0x8] sm:$0xff]
    %v2052 = vld [vmem:[#allocation8 + $0x10] sm:$0xff]
    %v2053 = vld [vmem:[#allocation8 + $0x18] sm:$0xff]
    %v2054 = vld [vmem:[#allocation8 + $0x20] sm:$0xff]
    %v2055 = vld [vmem:[#allocation8 + $0x28] sm:$0xff]
    %v2056 = vld [vmem:[#allocation8 + $0x30] sm:$0xff]
    %v2057 = vld [vmem:[#allocation8 + $0x38] sm:$0xff]
    %v2058 = vld [vmem:[#allocation8 + $0x40] sm:$0xff]
    %v2059 = vld [vmem:[#allocation8 + $0x48] sm:$0xff]
    %v2060 = vld [vmem:[#allocation8 + $0x50] sm:$0xff]
    %v2061 = vld [vmem:[#allocation8 + $0x58] sm:$0xff]
    %v2062 = vld [vmem:[#allocation8 + $0x60] sm:$0xff]
    %v2063 = vld [vmem:[#allocation8 + $0x68] sm:$0xff]
    %v2064 = vld [vmem:[#allocation8 + $0x70] sm:$0xff]
    %v2065 = vld [vmem:[#allocation8 + $0x78] sm:$0xff]
    %v2066 = vld [vmem:[#allocation8 + $0x80] sm:$0xff]
    %v2067 = vld [vmem:[#allocation8 + $0x88] sm:$0xff]
    %v2068 = vld [vmem:[#allocation8 + $0x90] sm:$0xff]
    %v2069 = vld [vmem:[#allocation8 + $0x98] sm:$0xff]
    %v2070 = vld [vmem:[#allocation8 + $0xa0] sm:$0xff]
    %v2071 = vld [vmem:[#allocation8 + $0xa8] sm:$0xff]
    %v2072 = vld [vmem:[#allocation8 + $0xb0] sm:$0xff]
    %v2073 = vld [vmem:[#allocation8 + $0xb8] sm:$0xff]
    %v2074 = vld [vmem:[#allocation8 + $0xc0] sm:$0xff]
    %v2075 = vld [vmem:[#allocation8 + $0xc8] sm:$0xff]
    %v2076 = vld [vmem:[#allocation8 + $0xd0] sm:$0xff]
    %v2077 = vld [vmem:[#allocation8 + $0xd8] sm:$0xff]
    %v2078 = vld [vmem:[#allocation8 + $0xe0] sm:$0xff]
    %v2079 = vld [vmem:[#allocation8 + $0xe8] sm:$0xff]
    %v2080 = vld [vmem:[#allocation8 + $0xf0] sm:$0xff]
    %v2081 = vld [vmem:[#allocation8 + $0xf8] sm:$0xff]
    %v2082 = vld [vmem:[#allocation8 + $0x100] sm:$0xff]
    %v2083 = vld [vmem:[#allocation8 + $0x108] sm:$0xff]
    %v2084 = vld [vmem:[#allocation8 + $0x110] sm:$0xff]
    %v2085 = vld [vmem:[#allocation8 + $0x118] sm:$0xff]
    %v2086 = vld [vmem:[#allocation8 + $0x120] sm:$0xff]
    %v2087 = vld [vmem:[#allocation8 + $0x128] sm:$0xff]
    %v2088 = vld [vmem:[#allocation8 + $0x130] sm:$0xff]
    %v2089 = vld [vmem:[#allocation8 + $0x138] sm:$0xff]
    %v2090 = vld [vmem:[#allocation8 + $0x140] sm:$0xff]
    %v2091 = vld [vmem:[#allocation8 + $0x148] sm:$0xff]
    %v2092 = vld [vmem:[#allocation8 + $0x150] sm:$0xff]
    %v2093 = vld [vmem:[#allocation8 + $0x158] sm:$0xff]
    %v2094 = vld [vmem:[#allocation8 + $0x160] sm:$0xff]
    %v2095 = vld [vmem:[#allocation8 + $0x168] sm:$0xff]
    %v2096 = vld [vmem:[#allocation8 + $0x170] sm:$0xff]
    %v2097 = vld [vmem:[#allocation8 + $0x178] sm:$0xff]
    %v2098 = vld [vmem:[#allocation8 + $0x180] sm:$0xff]
    %v2099 = vld [vmem:[#allocation8 + $0x188] sm:$0xff]
    %v2100 = vld [vmem:[#allocation8 + $0x190] sm:$0xff]
    %v2101 = vld [vmem:[#allocation8 + $0x198] sm:$0xff]
    %v2102 = vld [vmem:[#allocation8 + $0x1a0] sm:$0xff]
    %v2103 = vld [vmem:[#allocation8 + $0x1a8] sm:$0xff]
    %v2104 = vld [vmem:[#allocation8 + $0x1b0] sm:$0xff]
    %v2105 = vld [vmem:[#allocation8 + $0x1b8] sm:$0xff]
    %v2106 = vld [vmem:[#allocation8 + $0x1c0] sm:$0xff]
    %v2107 = vld [vmem:[#allocation8 + $0x1c8] sm:$0xff]
    %v2108 = vld [vmem:[#allocation8 + $0x1d0] sm:$0xff]
    %v2109 = vld [vmem:[#allocation8 + $0x1d8] sm:$0xff]
    %v2110 = vld [vmem:[#allocation8 + $0x1e0] sm:$0xff]
    %v2111 = vld [vmem:[#allocation8 + $0x1e8] sm:$0xff]
    %v2112 = vld [vmem:[#allocation8 + $0x1f0] sm:$0xff]
    %v2113 = vld [vmem:[#allocation8 + $0x1f8] sm:$0xff]
    %v2114 = vld [vmem:[#allocation8 + $0x200] sm:$0xff]
    %v2115 = vld [vmem:[#allocation8 + $0x208] sm:$0xff]
    %v2116 = vld [vmem:[#allocation8 + $0x210] sm:$0xff]
    %v2117 = vld [vmem:[#allocation8 + $0x218] sm:$0xff]
    %v2118 = vld [vmem:[#allocation8 + $0x220] sm:$0xff]
    %v2119 = vld [vmem:[#allocation8 + $0x228] sm:$0xff]
    %v2120 = vld [vmem:[#allocation8 + $0x230] sm:$0xff]
    %v2121 = vld [vmem:[#allocation8 + $0x238] sm:$0xff]
    %v2122 = vld [vmem:[#allocation8 + $0x240] sm:$0xff]
    %v2123 = vld [vmem:[#allocation8 + $0x248] sm:$0xff]
    %v2124 = vld [vmem:[#allocation8 + $0x250] sm:$0xff]
    %v2125 = vld [vmem:[#allocation8 + $0x258] sm:$0xff]
    %v2126 = vld [vmem:[#allocation8 + $0x260] sm:$0xff]
    %v2127 = vld [vmem:[#allocation8 + $0x268] sm:$0xff]
    %v2128 = vld [vmem:[#allocation8 + $0x270] sm:$0xff]
    %v2129 = vld [vmem:[#allocation8 + $0x278] sm:$0xff]
    %v2130 = vld [vmem:[#allocation8 + $0x280] sm:$0xff]
    %v2131 = vld [vmem:[#allocation8 + $0x288] sm:$0xff]
    %v2132 = vld [vmem:[#allocation8 + $0x290] sm:$0xff]
    %v2133 = vld [vmem:[#allocation8 + $0x298] sm:$0xff]
    %v2134 = vld [vmem:[#allocation8 + $0x2a0] sm:$0xff]
    %v2135 = vld [vmem:[#allocation8 + $0x2a8] sm:$0xff]
    %v2136 = vld [vmem:[#allocation8 + $0x2b0] sm:$0xff]
    %v2137 = vld [vmem:[#allocation8 + $0x2b8] sm:$0xff]
    %v2138 = vld [vmem:[#allocation8 + $0x2c0] sm:$0xff]
    %v2139 = vld [vmem:[#allocation8 + $0x2c8] sm:$0xff]
    %v2140 = vld [vmem:[#allocation8 + $0x2d0] sm:$0xff]
    %v2141 = vld [vmem:[#allocation8 + $0x2d8] sm:$0xff]
    %v2142 = vld [vmem:[#allocation8 + $0x2e0] sm:$0xff]
    %v2143 = vld [vmem:[#allocation8 + $0x2e8] sm:$0xff]
    %v2144 = vld [vmem:[#allocation8 + $0x2f0] sm:$0xff]
    %v2145 = vld [vmem:[#allocation8 + $0x2f8] sm:$0xff]
    %v2146 = vld [vmem:[#allocation8 + $0x300] sm:$0xff]
    %v2147 = vld [vmem:[#allocation8 + $0x308] sm:$0xff]
    %v2148 = vld [vmem:[#allocation8 + $0x310] sm:$0xff]
    %v2149 = vld [vmem:[#allocation8 + $0x318] sm:$0xff]
    %v2150 = vld [vmem:[#allocation8 + $0x320] sm:$0xff]
    %v2151 = vld [vmem:[#allocation8 + $0x328] sm:$0xff]
    %v2152 = vld [vmem:[#allocation8 + $0x330] sm:$0xff]
    %v2153 = vld [vmem:[#allocation8 + $0x338] sm:$0xff]
    %v2154 = vld [vmem:[#allocation8 + $0x340] sm:$0xff]
    %v2155 = vld [vmem:[#allocation8 + $0x348] sm:$0xff]
    %v2156 = vld [vmem:[#allocation8 + $0x350] sm:$0xff]
    %v2157 = vld [vmem:[#allocation8 + $0x358] sm:$0xff]
    %v2158 = vld [vmem:[#allocation8 + $0x360] sm:$0xff]
    %v2159 = vld [vmem:[#allocation8 + $0x368] sm:$0xff]
    %v2160 = vld [vmem:[#allocation8 + $0x370] sm:$0xff]
    %v2161 = vld [vmem:[#allocation8 + $0x378] sm:$0xff]
    %v2162 = vld [vmem:[#allocation10] sm:$0x1]
    %v2164 = vlaneseq
    %v2165 = vshrl.u32 %v2164, 7
    %v2166 = vsub.s32 0, %v2165
    %v2167 = vrot.slane %v2162, %v2166
    %2169 = vmatprep.subr.mxu0 0.0
    %2170 = vmatpush1.msra.mxu0 %v2065
    %2171 = vmatprep.subr.mxu0 0.0
    %2172 = vmatpush1.msra.mxu0 %v2064
    %2173 = vmatprep.subr.mxu0 0.0
    %2174 = vmatpush1.msra.mxu0 %v2063
    %2175 = vmatprep.subr.mxu0 0.0
    %2176 = vmatpush1.msra.mxu0 %v2062
    %2177 = vmatprep.subr.mxu0 0.0
    %2178 = vmatpush1.msra.mxu0 %v2061
    %2179 = vmatprep.subr.mxu0 0.0
    %2180 = vmatpush1.msra.mxu0 %v2060
    %2181 = vmatprep.subr.mxu0 0.0
    %2182 = vmatpush1.msra.mxu0 %v2059
    %2183 = vmatprep.subr.mxu0 0.0
    %2184 = vmatpush1.msra.mxu0 %v2058
    %2185 = vmatprep.subr.mxu0 0.0
    %2186 = vmatpush1.msra.mxu0 %v2057
    %2187 = vmatprep.subr.mxu0 0.0
    %2188 = vmatpush1.msra.mxu0 %v2056
    %2189 = vmatprep.subr.mxu0 0.0
    %2190 = vmatpush1.msra.mxu0 %v2055
    %2191 = vmatprep.subr.mxu0 0.0
    %2192 = vmatpush1.msra.mxu0 %v2054
    %2193 = vmatprep.subr.mxu0 0.0
    %2194 = vmatpush1.msra.mxu0 %v2053
    %2195 = vmatprep.subr.mxu0 0.0
    %2196 = vmatpush1.msra.mxu0 %v2052
    %2197 = vmatprep.subr.mxu0 0.0
    %2198 = vmatpush1.msra.mxu0 %v2051
    %2199 = vmatprep.subr.mxu0 0.0
    %2200 = vmatpush1.msra.mxu0 %v2050
    %2201 = vmatprep.subr.mxu0 0.0
    %2202 = vmatpush2.msra.mxu0 %v2081
    %2203 = vmatprep.subr.mxu0 0.0
    %2204 = vmatpush2.msra.mxu0 %v2080
    %2205 = vmatprep.subr.mxu0 0.0
    %2206 = vmatpush2.msra.mxu0 %v2079
    %2207 = vmatprep.subr.mxu0 0.0
    %2208 = vmatpush2.msra.mxu0 %v2078
    %2209 = vmatprep.subr.mxu0 0.0
    %2210 = vmatpush2.msra.mxu0 %v2077
    %2211 = vmatprep.subr.mxu0 0.0
    %2212 = vmatpush2.msra.mxu0 %v2076
    %2213 = vmatprep.subr.mxu0 0.0
    %2214 = vmatpush2.msra.mxu0 %v2075
    %2215 = vmatprep.subr.mxu0 0.0
    %2216 = vmatpush2.msra.mxu0 %v2074
    %2217 = vmatprep.subr.mxu0 0.0
    %2218 = vmatpush2.msra.mxu0 %v2073
    %2219 = vmatprep.subr.mxu0 0.0
    %2220 = vmatpush2.msra.mxu0 %v2072
    %2221 = vmatprep.subr.mxu0 0.0
    %2222 = vmatpush2.msra.mxu0 %v2071
    %2223 = vmatprep.subr.mxu0 0.0
    %2224 = vmatpush2.msra.mxu0 %v2070
    %2225 = vmatprep.subr.mxu0 0.0
    %2226 = vmatpush2.msra.mxu0 %v2069
    %2227 = vmatprep.subr.mxu0 0.0
    %2228 = vmatpush2.msra.mxu0 %v2068
    %2229 = vmatprep.subr.mxu0 0.0
    %2230 = vmatpush2.msra.mxu0 %v2067
    %2231 = vmatprep.subr.mxu0 0.0
    %2232 = vmatpush2.msra.mxu0 %v2066
    %2233 = vmatprep.mubr.f32.mxu0 %v2044
    %2234 = vmatmul.mubr.f32.gmra.mxu0 %v2043
    %v2235 = vpop.f32.mrf.mxu0
    %v2236 = vadd.f32 %v2167, %v2235
    %v2237 = vpop.f32.mrf.mxu0
    %2238 = vdwg.mxu0
    %2239 = vmatprep.subr.mxu0 0.0
    %2240 = vmatpush1.msra.mxu0 %v2097
    %2241 = vmatprep.subr.mxu0 0.0
    %2242 = vmatpush1.msra.mxu0 %v2096
    %2243 = vmatprep.subr.mxu0 0.0
    %2244 = vmatpush1.msra.mxu0 %v2095
    %2245 = vmatprep.subr.mxu0 0.0
    %2246 = vmatpush1.msra.mxu0 %v2094
    %2247 = vmatprep.subr.mxu0 0.0
    %2248 = vmatpush1.msra.mxu0 %v2093
    %2249 = vmatprep.subr.mxu0 0.0
    %2250 = vmatpush1.msra.mxu0 %v2092
    %2251 = vmatprep.subr.mxu0 0.0
    %2252 = vmatpush1.msra.mxu0 %v2091
    %2253 = vmatprep.subr.mxu0 0.0
    %2254 = vmatpush1.msra.mxu0 %v2090
    %2255 = vmatprep.subr.mxu0 0.0
    %2256 = vmatpush1.msra.mxu0 %v2089
    %2257 = vmatprep.subr.mxu0 0.0
    %2258 = vmatpush1.msra.mxu0 %v2088
    %2259 = vmatprep.subr.mxu0 0.0
    %2260 = vmatpush1.msra.mxu0 %v2087
    %2261 = vmatprep.subr.mxu0 0.0
    %2262 = vmatpush1.msra.mxu0 %v2086
    %2263 = vmatprep.subr.mxu0 0.0
    %2264 = vmatpush1.msra.mxu0 %v2085
    %2265 = vmatprep.subr.mxu0 0.0
    %2266 = vmatpush1.msra.mxu0 %v2084
    %2267 = vmatprep.subr.mxu0 0.0
    %2268 = vmatpush1.msra.mxu0 %v2083
    %2269 = vmatprep.subr.mxu0 0.0
    %2270 = vmatpush1.msra.mxu0 %v2082
    %2271 = vmatprep.subr.mxu0 0.0
    %2272 = vmatpush2.msra.mxu0 %v2113
    %2273 = vmatprep.subr.mxu0 0.0
    %2274 = vmatpush2.msra.mxu0 %v2112
    %2275 = vmatprep.subr.mxu0 0.0
    %2276 = vmatpush2.msra.mxu0 %v2111
    %2277 = vmatprep.subr.mxu0 0.0
    %2278 = vmatpush2.msra.mxu0 %v2110
    %2279 = vmatprep.subr.mxu0 0.0
    %2280 = vmatpush2.msra.mxu0 %v2109
    %2281 = vmatprep.subr.mxu0 0.0
    %2282 = vmatpush2.msra.mxu0 %v2108
    %2283 = vmatprep.subr.mxu0 0.0
    %2284 = vmatpush2.msra.mxu0 %v2107
    %2285 = vmatprep.subr.mxu0 0.0
    %2286 = vmatpush2.msra.mxu0 %v2106
    %2287 = vmatprep.subr.mxu0 0.0
    %2288 = vmatpush2.msra.mxu0 %v2105
    %2289 = vmatprep.subr.mxu0 0.0
    %2290 = vmatpush2.msra.mxu0 %v2104
    %2291 = vmatprep.subr.mxu0 0.0
    %2292 = vmatpush2.msra.mxu0 %v2103
    %2293 = vmatprep.subr.mxu0 0.0
    %2294 = vmatpush2.msra.mxu0 %v2102
    %2295 = vmatprep.subr.mxu0 0.0
    %2296 = vmatpush2.msra.mxu0 %v2101
    %2297 = vmatprep.subr.mxu0 0.0
    %2298 = vmatpush2.msra.mxu0 %v2100
    %2299 = vmatprep.subr.mxu0 0.0
    %2300 = vmatpush2.msra.mxu0 %v2099
    %2301 = vmatprep.subr.mxu0 0.0
    %2302 = vmatpush2.msra.mxu0 %v2098
    %2303 = vmatprep.mubr.f32.mxu0 %v2046
    %2304 = vmatmul.mubr.f32.gmra.mxu0 %v2045
    %v2305 = vpop.f32.mrf.mxu0
    %v2306 = vadd.f32 %v2236, %v2305
    %v2307 = vpop.f32.mrf.mxu0
    %2308 = vdwg.mxu0
    %2309 = vmatprep.subr.mxu0 0.0
    %2310 = vmatpush1.msra.mxu0 %v2129
    %2311 = vmatprep.subr.mxu0 0.0
    %2312 = vmatpush1.msra.mxu0 %v2128
    %2313 = vmatprep.subr.mxu0 0.0
    %2314 = vmatpush1.msra.mxu0 %v2127
    %2315 = vmatprep.subr.mxu0 0.0
    %2316 = vmatpush1.msra.mxu0 %v2126
    %2317 = vmatprep.subr.mxu0 0.0
    %2318 = vmatpush1.msra.mxu0 %v2125
    %2319 = vmatprep.subr.mxu0 0.0
    %2320 = vmatpush1.msra.mxu0 %v2124
    %2321 = vmatprep.subr.mxu0 0.0
    %2322 = vmatpush1.msra.mxu0 %v2123
    %2323 = vmatprep.subr.mxu0 0.0
    %2324 = vmatpush1.msra.mxu0 %v2122
    %2325 = vmatprep.subr.mxu0 0.0
    %2326 = vmatpush1.msra.mxu0 %v2121
    %2327 = vmatprep.subr.mxu0 0.0
    %2328 = vmatpush1.msra.mxu0 %v2120
    %2329 = vmatprep.subr.mxu0 0.0
    %2330 = vmatpush1.msra.mxu0 %v2119
    %2331 = vmatprep.subr.mxu0 0.0
    %2332 = vmatpush1.msra.mxu0 %v2118
    %2333 = vmatprep.subr.mxu0 0.0
    %2334 = vmatpush1.msra.mxu0 %v2117
    %2335 = vmatprep.subr.mxu0 0.0
    %2336 = vmatpush1.msra.mxu0 %v2116
    %2337 = vmatprep.subr.mxu0 0.0
    %2338 = vmatpush1.msra.mxu0 %v2115
    %2339 = vmatprep.subr.mxu0 0.0
    %2340 = vmatpush1.msra.mxu0 %v2114
    %2341 = vmatprep.subr.mxu0 0.0
    %2342 = vmatpush2.msra.mxu0 %v2145
    %2343 = vmatprep.subr.mxu0 0.0
    %2344 = vmatpush2.msra.mxu0 %v2144
    %2345 = vmatprep.subr.mxu0 0.0
    %2346 = vmatpush2.msra.mxu0 %v2143
    %2347 = vmatprep.subr.mxu0 0.0
    %2348 = vmatpush2.msra.mxu0 %v2142
    %2349 = vmatprep.subr.mxu0 0.0
    %2350 = vmatpush2.msra.mxu0 %v2141
    %2351 = vmatprep.subr.mxu0 0.0
    %2352 = vmatpush2.msra.mxu0 %v2140
    %2353 = vmatprep.subr.mxu0 0.0
    %2354 = vmatpush2.msra.mxu0 %v2139
    %2355 = vmatprep.subr.mxu0 0.0
    %2356 = vmatpush2.msra.mxu0 %v2138
    %2357 = vmatprep.subr.mxu0 0.0
    %2358 = vmatpush2.msra.mxu0 %v2137
    %2359 = vmatprep.subr.mxu0 0.0
    %2360 = vmatpush2.msra.mxu0 %v2136
    %2361 = vmatprep.subr.mxu0 0.0
    %2362 = vmatpush2.msra.mxu0 %v2135
    %2363 = vmatprep.subr.mxu0 0.0
    %2364 = vmatpush2.msra.mxu0 %v2134
    %2365 = vmatprep.subr.mxu0 0.0
    %2366 = vmatpush2.msra.mxu0 %v2133
    %2367 = vmatprep.subr.mxu0 0.0
    %2368 = vmatpush2.msra.mxu0 %v2132
    %2369 = vmatprep.subr.mxu0 0.0
    %2370 = vmatpush2.msra.mxu0 %v2131
    %2371 = vmatprep.subr.mxu0 0.0
    %2372 = vmatpush2.msra.mxu0 %v2130
    %2373 = vmatprep.mubr.f32.mxu0 %v2048
    %2374 = vmatmul.mubr.f32.gmra.mxu0 %v2047
    %v2375 = vpop.f32.mrf.mxu0
    %v2376 = vadd.f32 %v2306, %v2375
    %v2377 = vpop.f32.mrf.mxu0
    %2378 = vdwg.mxu0
    %2379 = vmatprep.subr.mxu0 0.0
    %2380 = vmatpush1.msra.mxu0 %v2161
    %2381 = vmatprep.subr.mxu0 0.0
    %2382 = vmatpush1.msra.mxu0 %v2160
    %2383 = vmatprep.subr.mxu0 0.0
    %2384 = vmatpush1.msra.mxu0 %v2159
    %2385 = vmatprep.subr.mxu0 0.0
    %2386 = vmatpush1.msra.mxu0 %v2158
    %2387 = vmatprep.subr.mxu0 0.0
    %2388 = vmatpush1.msra.mxu0 %v2157
    %2389 = vmatprep.subr.mxu0 0.0
    %2390 = vmatpush1.msra.mxu0 %v2156
    %2391 = vmatprep.subr.mxu0 0.0
    %2392 = vmatpush1.msra.mxu0 %v2155
    %2393 = vmatprep.subr.mxu0 0.0
    %2394 = vmatpush1.msra.mxu0 %v2154
    %2395 = vmatprep.subr.mxu0 0.0
    %2396 = vmatpush1.msra.mxu0 %v2153
    %2397 = vmatprep.subr.mxu0 0.0
    %2398 = vmatpush1.msra.mxu0 %v2152
    %2399 = vmatprep.subr.mxu0 0.0
    %2400 = vmatpush1.msra.mxu0 %v2151
    %2401 = vmatprep.subr.mxu0 0.0
    %2402 = vmatpush1.msra.mxu0 %v2150
    %2403 = vmatprep.subr.mxu0 0.0
    %2404 = vmatpush1.msra.mxu0 %v2149
    %2405 = vmatprep.subr.mxu0 0.0
    %2406 = vmatpush1.msra.mxu0 %v2148
    %2407 = vmatprep.subr.mxu0 0.0
    %2408 = vmatpush1.msra.mxu0 %v2147
    %2409 = vmatprep.subr.mxu0 0.0
    %2410 = vmatpush1.msra.mxu0 %v2146
    %2411 = vmatprep.subr.mxu0 0.0
    %2412 = vmatpush2.msra.mxu0 0.0
    %2413 = vmatprep.subr.mxu0 0.0
    %2414 = vmatpush2.msra.mxu0 0.0
    %2415 = vmatprep.subr.mxu0 0.0
    %2416 = vmatpush2.msra.mxu0 0.0
    %2417 = vmatprep.subr.mxu0 0.0
    %2418 = vmatpush2.msra.mxu0 0.0
    %2419 = vmatprep.subr.mxu0 0.0
    %2420 = vmatpush2.msra.mxu0 0.0
    %2421 = vmatprep.subr.mxu0 0.0
    %2422 = vmatpush2.msra.mxu0 0.0
    %2423 = vmatprep.subr.mxu0 0.0
    %2424 = vmatpush2.msra.mxu0 0.0
    %2425 = vmatprep.subr.mxu0 0.0
    %2426 = vmatpush2.msra.mxu0 0.0
    %2427 = vmatprep.subr.mxu0 0.0
    %2428 = vmatpush2.msra.mxu0 0.0
    %2429 = vmatprep.subr.mxu0 0.0
    %2430 = vmatpush2.msra.mxu0 0.0
    %2431 = vmatprep.subr.mxu0 0.0
    %2432 = vmatpush2.msra.mxu0 0.0
    %2433 = vmatprep.subr.mxu0 0.0
    %2434 = vmatpush2.msra.mxu0 0.0
    %2435 = vmatprep.subr.mxu0 0.0
    %2436 = vmatpush2.msra.mxu0 0.0
    %2437 = vmatprep.subr.mxu0 0.0
    %2438 = vmatpush2.msra.mxu0 0.0
    %2439 = vmatprep.subr.mxu0 0.0
    %2440 = vmatpush2.msra.mxu0 0.0
    %2441 = vmatprep.subr.mxu0 0.0
    %2442 = vmatpush2.msra.mxu0 0.0
    %2443 = vmatprep.mubr.f32.mxu0 0.0
    %2444 = vmatmul.mubr.f32.gmra.mxu0 %v2049
    %v2445 = vpop.f32.mrf.mxu0
    %v2446 = vadd.f32 %v2376, %v2445
    %v2447 = vpop.f32.mrf.mxu0
    %2448 = vdwg.mxu0
    %2449 = vst [vmem:[#allocation11] sm:$0xff] %v2446
    // Predicated region
    $region42: #{tpu_custom_call.1} parent=1 // pred_check
      _
    $region43: #{tpu_custom_call.1} parent=1 // pred_check_branch
      %2451 = sbr.rel (0) target = $region45
    $region44: #{tpu_custom_call.1} parent=1 // pred_region
      %s2453 = ssub.s32 128, 128
      %2454 = vsyncadd [#allocation4], %s2453
      %s2456 = sshll.u32 [#allocation11], 4
      %s2457 = int_to_ptr.vmem [resolvable:$true] %s2456
      %2459 = dma.vmem_to_hbm [thread:$0]  %s2457, 128, %s5, [#allocation4]
    $region45: #{tpu_custom_call.1} parent=1 // pred_fallthru
      _
    // Predicated region
    $region46: #{tpu_custom_call.1} parent=1 // pred_check
      _
    $region47: #{tpu_custom_call.1} parent=1 // pred_check_branch
      %2461 = sbr.rel (0) target = $region49
    $region48: #{tpu_custom_call.1} parent=1 // pred_region
      %2462 = dma.done [#allocation4], 128
    $region49: #{tpu_custom_call.1} parent=1 // pred_fallthru
      _
    %2463 = vsyncpa [#allocation3], 1
    %2464 = vsyncpa [#allocation6], 1
    %2465 = vsyncpa [#allocation9], 1
    %2466 = vsyncpa [#allocation4], 1

</llo_original>
